<compile_context>
chip_gen: v7x
topology: tpu7x:2x2x1
jax: 0.10.0
libtpu: 0.0.40
codegen_flags: <defaults>
</compile_context>

<pallas_src>
import functools

import jax
import jax.numpy as jnp
from jax.experimental import pallas as pl
from jax.experimental.pallas import tpu as pltpu


# ---------------------------------------------------------------------------
# In-kernel soft morphology helpers on an (H, W) f32 array.
#
# PyTorch's max_pool2d pads with -inf (and the min-pool built as
# -maxpool(-x) therefore pads with +inf).  For a 3-tap min/max, +/-inf
# padding is exactly equivalent to replicate-edge padding
# (min(x0, x0, x1) == min(x0, x1)), so the shifts below replicate the edge
# row/column.  This removes the captured +/-BIG constant (the previous
# compile error) and the explicit pad-fill materialization.
# (pltpu.roll + a hoisted edge mask is an alternative on hardware; plain
# static-slice concatenation is kept here for TPU-interpret portability.)
# ---------------------------------------------------------------------------
def _shift_down(x):   # out[i, :] = x[max(i - 1, 0), :]
    return jnp.concatenate([x[:1, :], x[:-1, :]], axis=0)


def _shift_up(x):     # out[i, :] = x[min(i + 1, H - 1), :]
    return jnp.concatenate([x[1:, :], x[-1:, :]], axis=0)


def _shift_right(x):  # out[:, j] = x[:, max(j - 1, 0)]
    return jnp.concatenate([x[:, :1], x[:, :-1]], axis=1)


def _shift_left(x):   # out[:, j] = x[:, min(j + 1, W - 1)]
    return jnp.concatenate([x[:, 1:], x[:, -1:]], axis=1)


def _soft_erode(img):
    # p1 = -maxpool(-img, (3,1), pad=(1,0)); p2 = -maxpool(-img, (1,3), pad=(0,1))
    p1 = jnp.minimum(jnp.minimum(img, _shift_down(img)), _shift_up(img))
    p2 = jnp.minimum(jnp.minimum(img, _shift_right(img)), _shift_left(img))
    return jnp.minimum(p1, p2)


def _soft_dilate(img):
    # maxpool(img, (3,3), pad=(1,1)) -- separable: rows then cols.
    r = jnp.maximum(jnp.maximum(img, _shift_down(img)), _shift_up(img))
    return jnp.maximum(jnp.maximum(r, _shift_right(r)), _shift_left(r))


def _soft_skel(img, iter_):
    # Erosion-hoisted rewrite of the reference:
    #   img1 = open(img) = dilate(erode(img)); skel = relu(img - img1)
    #   loop: img = erode(img); img1 = open(img); ...
    # erode(img) at the top of each loop iteration is exactly the erosion
    # already computed inside the previous open(), so it is carried instead
    # of recomputed: (iter_+1) erosions per skeleton instead of (2*iter_+1).
    e = _soft_erode(img)
    img1 = _soft_dilate(e)
    skel = jax.nn.relu(img - img1)
    for _ in range(iter_):              # static unroll (iter_ = 3)
        img = e
        e = _soft_erode(img)
        img1 = _soft_dilate(e)
        delta = jax.nn.relu(img - img1)
        skel = skel + jax.nn.relu(delta - skel * delta)
    return skel


def _sum2d(t, ones_row):
    # Global sum: collapse the sublane axis on the MXU ((1,H) @ (H,W) -> (1,W)),
    # then one small lane reduce.  The MXU is otherwise idle in this kernel.
    row = jnp.dot(ones_row, t, preferred_element_type=jnp.float32)
    return jnp.sum(row)


# ---------------------------------------------------------------------------
# Pallas kernel: one (batch, channel) slice per grid step (channel 0 already
# excluded by the grid / index_map).  Each step writes four disjoint,
# lane-dense (1, 1, 8, 128) partial-sum tiles (scalar broadcast), so there is
# no cross-step state and both grid axes can be marked "parallel":
#   s0 = sum(skel_pred * y_true), s1 = sum(skel_pred),
#   s2 = sum(skel_true * y_pred), s3 = sum(skel_true)
# ---------------------------------------------------------------------------
def _cldice_sums_kernel(yt_ref, yp_ref, o0, o1, o2, o3, *, iter_):
    yt = yt_ref[0, 0].astype(jnp.float32)   # (H, W)
    yp = yp_ref[0, 0].astype(jnp.float32)   # (H, W)

    h, _ = yt.shape
    ones_row = jnp.ones((1, h), jnp.float32)

    skel_p = _soft_skel(yp, iter_)
    skel_t = _soft_skel(yt, iter_)

    s0 = _sum2d(skel_p * yt, ones_row)
    s1 = _sum2d(skel_p, ones_row)
    s2 = _sum2d(skel_t * yp, ones_row)
    s3 = _sum2d(skel_t, ones_row)

    o0[...] = jnp.full(o0.shape, s0, o0.dtype)
    o1[...] = jnp.full(o1.shape, s1, o1.dtype)
    o2[...] = jnp.full(o2.shape, s2, o2.dtype)
    o3[...] = jnp.full(o3.shape, s3, o3.dtype)


def soft_cldice_loss(y_true, y_pred, iter_=3, smooth=1.0):
    """Pallas implementation of soft_cldice.forward(y_true, y_pred)."""
    N, C, H, W = y_true.shape
    assert y_pred.shape == (N, C, H, W)

    if C < 2:
        # Reference sums over channels [1:], which are empty -> all sums 0,
        # tprec = tsens = smooth/smooth = 1, cl_dice = 0.
        return jnp.float32(0.0)

    Cm1 = C - 1
    kernel = functools.partial(_cldice_sums_kernel, iter_=iter_)

    # Channel 0 is excluded by the loss ([:, 1:, ...]) -> skip it in the grid.
    in_spec = pl.BlockSpec((1, 1, H, W), lambda n, c: (n, c + 1, 0, 0))
    out_spec = pl.BlockSpec((1, 1, 8, 128), lambda n, c: (n, c, 0, 0))
    out_sds = jax.ShapeDtypeStruct((N, Cm1, 8, 128), jnp.float32)

    # VMEM budget: 2 inputs x 2 pipeline buffers + ~16 live f32 temporaries in
    # the unrolled skeleton chain + double-buffered output tiles.
    slice_bytes = H * W * 4
    working_set = (2 * 2 + 16) * slice_bytes + 4 * 2 * 8 * 128 * 4
    vmem_limit = int(min(48 * 1024 * 1024,
                         max(32 * 1024 * 1024, 2 * working_set)))
    # TODO(synk): for very large H*W add spatial row-tiling with a
    # (2*iter_+2)-row halo so the working set fits v7x's 64 MiB VMEM.

    # ~VALU ops/element: 2 skeletons x ((iter_+1) erode/dilate + relu updates).
    flops_per_elem = 2 * (9 * (iter_ + 1) + 4 * iter_ + 4) + 8
    cost = pl.CostEstimate(
        flops=int(N * Cm1 * H * W * flops_per_elem),
        transcendentals=0,
        bytes_accessed=int(2 * N * Cm1 * slice_bytes
                           + 4 * N * Cm1 * 8 * 128 * 4),
    )

    s0, s1, s2, s3 = pl.pallas_call(
        kernel,
        out_shape=(out_sds, out_sds, out_sds, out_sds),
        grid=(N, Cm1),
        in_specs=[in_spec, in_spec],
        out_specs=(out_spec, out_spec, out_spec, out_spec),
        compiler_params=pltpu.CompilerParams(
            dimension_semantics=("parallel", "parallel"),
            vmem_limit_bytes=vmem_limit),
        cost_estimate=cost,
    )(y_true, y_pred)

    sum0 = jnp.sum(s0[:, :, 0, 0])
    sum1 = jnp.sum(s1[:, :, 0, 0])
    sum2 = jnp.sum(s2[:, :, 0, 0])
    sum3 = jnp.sum(s3[:, :, 0, 0])

    tprec = (sum0 + smooth) / (sum1 + smooth)
    tsens = (sum2 + smooth) / (sum3 + smooth)
    return 1.0 - 2.0 * (tprec * tsens) / (tprec + tsens)


if __name__ == "__main__":
    key = jax.random.PRNGKey(0)
    k1, k2 = jax.random.split(key)
    N, C, H, W = 2, 4, 16, 16
    # "Soft" probability maps in [0, 1], like the PyTorch module expects.
    y_true = jax.random.uniform(k1, (N, C, H, W), dtype=jnp.float32)
    y_pred = jax.random.uniform(k2, (N, C, H, W), dtype=jnp.float32)

    loss = soft_cldice_loss(y_true, y_pred, iter_=3, smooth=1.0)
    jax.block_until_ready(loss)
    print("KERNEL_OK")
</pallas_src>

<mosaic_0001>
module attributes {stable_mosaic.version = 11 : i64} {
  func.func @_cldice_sums_kernel(%arg0: i32, %arg1: i32, %arg2: memref<1x1x16x16xf32, #tpu.memory_space<vmem>>, %arg3: memref<1x1x16x16xf32, #tpu.memory_space<vmem>>, %arg4: memref<1x1x8x128xf32, #tpu.memory_space<vmem>>, %arg5: memref<1x1x8x128xf32, #tpu.memory_space<vmem>>, %arg6: memref<1x1x8x128xf32, #tpu.memory_space<vmem>>, %arg7: memref<1x1x8x128xf32, #tpu.memory_space<vmem>>) attributes {dimension_semantics = [#tpu.dimension_semantics<parallel>, #tpu.dimension_semantics<parallel>], iteration_bounds = array<i64: 2, 3>, scalar_prefetch = 0 : i64, scratch_operands = 0 : i64, tpu.core_type = #tpu.core_type<tc>, window_params = [{transform_indices = @transform_0, window_bounds = array<i64: 1, 1, 16, 16>}, {transform_indices = @transform_1, window_bounds = array<i64: 1, 1, 16, 16>}, {transform_indices = @transform_2, window_bounds = array<i64: 1, 1, 8, 128>}, {transform_indices = @transform_3, window_bounds = array<i64: 1, 1, 8, 128>}, {transform_indices = @transform_4, window_bounds = array<i64: 1, 1, 8, 128>}, {transform_indices = @transform_5, window_bounds = array<i64: 1, 1, 8, 128>}]} {
    %c0 = arith.constant 0 : index
    %c0_0 = arith.constant 0 : index
    %c0_1 = arith.constant 0 : index
    %c0_2 = arith.constant 0 : index
    %0 = vector.load %arg2[%c0, %c0_0, %c0_1, %c0_2] : memref<1x1x16x16xf32, #tpu.memory_space<vmem>>, vector<1x1x16x16xf32>
    %1 = vector.shape_cast %0 : vector<1x1x16x16xf32> to vector<16x16xf32>
    %c0_3 = arith.constant 0 : index
    %c0_4 = arith.constant 0 : index
    %c0_5 = arith.constant 0 : index
    %c0_6 = arith.constant 0 : index
    %2 = vector.load %arg3[%c0_3, %c0_4, %c0_5, %c0_6] : memref<1x1x16x16xf32, #tpu.memory_space<vmem>>, vector<1x1x16x16xf32>
    %3 = vector.shape_cast %2 : vector<1x1x16x16xf32> to vector<16x16xf32>
    %cst = arith.constant 1.000000e+00 : f32
    %4 = vector.broadcast %cst : f32 to vector<1x16xf32>
    %5 = vector.extract_strided_slice %3 {offsets = [0, 0], sizes = [1, 16], strides = [1, 1]} : vector<16x16xf32> to vector<1x16xf32>
    %6 = vector.extract_strided_slice %3 {offsets = [0, 0], sizes = [15, 16], strides = [1, 1]} : vector<16x16xf32> to vector<15x16xf32>
    %7 = tpu.concatenate %5, %6 in 0 : vector<1x16xf32>, vector<15x16xf32> -> vector<16x16xf32>
    %8 = arith.minimumf %3, %7 : vector<16x16xf32>
    %9 = vector.extract_strided_slice %3 {offsets = [1, 0], sizes = [15, 16], strides = [1, 1]} : vector<16x16xf32> to vector<15x16xf32>
    %10 = vector.extract_strided_slice %3 {offsets = [15, 0], sizes = [1, 16], strides = [1, 1]} : vector<16x16xf32> to vector<1x16xf32>
    %11 = tpu.concatenate %9, %10 in 0 : vector<15x16xf32>, vector<1x16xf32> -> vector<16x16xf32>
    %12 = arith.minimumf %8, %11 : vector<16x16xf32>
    %13 = vector.extract_strided_slice %3 {offsets = [0, 0], sizes = [16, 1], strides = [1, 1]} : vector<16x16xf32> to vector<16x1xf32>
    %14 = vector.extract_strided_slice %3 {offsets = [0, 0], sizes = [16, 15], strides = [1, 1]} : vector<16x16xf32> to vector<16x15xf32>
    %15 = tpu.concatenate %13, %14 in 1 : vector<16x1xf32>, vector<16x15xf32> -> vector<16x16xf32>
    %16 = arith.minimumf %3, %15 : vector<16x16xf32>
    %17 = vector.extract_strided_slice %3 {offsets = [0, 1], sizes = [16, 15], strides = [1, 1]} : vector<16x16xf32> to vector<16x15xf32>
    %18 = vector.extract_strided_slice %3 {offsets = [0, 15], sizes = [16, 1], strides = [1, 1]} : vector<16x16xf32> to vector<16x1xf32>
    %19 = tpu.concatenate %17, %18 in 1 : vector<16x15xf32>, vector<16x1xf32> -> vector<16x16xf32>
    %20 = arith.minimumf %16, %19 : vector<16x16xf32>
    %21 = arith.minimumf %12, %20 : vector<16x16xf32>
    %22 = vector.extract_strided_slice %21 {offsets = [0, 0], sizes = [1, 16], strides = [1, 1]} : vector<16x16xf32> to vector<1x16xf32>
    %23 = vector.extract_strided_slice %21 {offsets = [0, 0], sizes = [15, 16], strides = [1, 1]} : vector<16x16xf32> to vector<15x16xf32>
    %24 = tpu.concatenate %22, %23 in 0 : vector<1x16xf32>, vector<15x16xf32> -> vector<16x16xf32>
    %25 = arith.maximumf %21, %24 : vector<16x16xf32>
    %26 = vector.extract_strided_slice %21 {offsets = [1, 0], sizes = [15, 16], strides = [1, 1]} : vector<16x16xf32> to vector<15x16xf32>
    %27 = vector.extract_strided_slice %21 {offsets = [15, 0], sizes = [1, 16], strides = [1, 1]} : vector<16x16xf32> to vector<1x16xf32>
    %28 = tpu.concatenate %26, %27 in 0 : vector<15x16xf32>, vector<1x16xf32> -> vector<16x16xf32>
    %29 = arith.maximumf %25, %28 : vector<16x16xf32>
    %30 = vector.extract_strided_slice %29 {offsets = [0, 0], sizes = [16, 1], strides = [1, 1]} : vector<16x16xf32> to vector<16x1xf32>
    %31 = vector.extract_strided_slice %29 {offsets = [0, 0], sizes = [16, 15], strides = [1, 1]} : vector<16x16xf32> to vector<16x15xf32>
    %32 = tpu.concatenate %30, %31 in 1 : vector<16x1xf32>, vector<16x15xf32> -> vector<16x16xf32>
    %33 = arith.maximumf %29, %32 : vector<16x16xf32>
    %34 = vector.extract_strided_slice %29 {offsets = [0, 1], sizes = [16, 15], strides = [1, 1]} : vector<16x16xf32> to vector<16x15xf32>
    %35 = vector.extract_strided_slice %29 {offsets = [0, 15], sizes = [16, 1], strides = [1, 1]} : vector<16x16xf32> to vector<16x1xf32>
    %36 = tpu.concatenate %34, %35 in 1 : vector<16x15xf32>, vector<16x1xf32> -> vector<16x16xf32>
    %37 = arith.maximumf %33, %36 : vector<16x16xf32>
    %38 = arith.subf %3, %37 : vector<16x16xf32>
    %cst_7 = arith.constant 0.000000e+00 : f32
    %39 = vector.broadcast %cst_7 : f32 to vector<16x16xf32>
    %40 = arith.maximumf %38, %39 : vector<16x16xf32>
    %41 = vector.extract_strided_slice %21 {offsets = [0, 0], sizes = [1, 16], strides = [1, 1]} : vector<16x16xf32> to vector<1x16xf32>
    %42 = vector.extract_strided_slice %21 {offsets = [0, 0], sizes = [15, 16], strides = [1, 1]} : vector<16x16xf32> to vector<15x16xf32>
    %43 = tpu.concatenate %41, %42 in 0 : vector<1x16xf32>, vector<15x16xf32> -> vector<16x16xf32>
    %44 = arith.minimumf %21, %43 : vector<16x16xf32>
    %45 = vector.extract_strided_slice %21 {offsets = [1, 0], sizes = [15, 16], strides = [1, 1]} : vector<16x16xf32> to vector<15x16xf32>
    %46 = vector.extract_strided_slice %21 {offsets = [15, 0], sizes = [1, 16], strides = [1, 1]} : vector<16x16xf32> to vector<1x16xf32>
    %47 = tpu.concatenate %45, %46 in 0 : vector<15x16xf32>, vector<1x16xf32> -> vector<16x16xf32>
    %48 = arith.minimumf %44, %47 : vector<16x16xf32>
    %49 = vector.extract_strided_slice %21 {offsets = [0, 0], sizes = [16, 1], strides = [1, 1]} : vector<16x16xf32> to vector<16x1xf32>
    %50 = vector.extract_strided_slice %21 {offsets = [0, 0], sizes = [16, 15], strides = [1, 1]} : vector<16x16xf32> to vector<16x15xf32>
    %51 = tpu.concatenate %49, %50 in 1 : vector<16x1xf32>, vector<16x15xf32> -> vector<16x16xf32>
    %52 = arith.minimumf %21, %51 : vector<16x16xf32>
    %53 = vector.extract_strided_slice %21 {offsets = [0, 1], sizes = [16, 15], strides = [1, 1]} : vector<16x16xf32> to vector<16x15xf32>
    %54 = vector.extract_strided_slice %21 {offsets = [0, 15], sizes = [16, 1], strides = [1, 1]} : vector<16x16xf32> to vector<16x1xf32>
    %55 = tpu.concatenate %53, %54 in 1 : vector<16x15xf32>, vector<16x1xf32> -> vector<16x16xf32>
    %56 = arith.minimumf %52, %55 : vector<16x16xf32>
    %57 = arith.minimumf %48, %56 : vector<16x16xf32>
    %58 = vector.extract_strided_slice %57 {offsets = [0, 0], sizes = [1, 16], strides = [1, 1]} : vector<16x16xf32> to vector<1x16xf32>
    %59 = vector.extract_strided_slice %57 {offsets = [0, 0], sizes = [15, 16], strides = [1, 1]} : vector<16x16xf32> to vector<15x16xf32>
    %60 = tpu.concatenate %58, %59 in 0 : vector<1x16xf32>, vector<15x16xf32> -> vector<16x16xf32>
    %61 = arith.maximumf %57, %60 : vector<16x16xf32>
    %62 = vector.extract_strided_slice %57 {offsets = [1, 0], sizes = [15, 16], strides = [1, 1]} : vector<16x16xf32> to vector<15x16xf32>
    %63 = vector.extract_strided_slice %57 {offsets = [15, 0], sizes = [1, 16], strides = [1, 1]} : vector<16x16xf32> to vector<1x16xf32>
    %64 = tpu.concatenate %62, %63 in 0 : vector<15x16xf32>, vector<1x16xf32> -> vector<16x16xf32>
    %65 = arith.maximumf %61, %64 : vector<16x16xf32>
    %66 = vector.extract_strided_slice %65 {offsets = [0, 0], sizes = [16, 1], strides = [1, 1]} : vector<16x16xf32> to vector<16x1xf32>
    %67 = vector.extract_strided_slice %65 {offsets = [0, 0], sizes = [16, 15], strides = [1, 1]} : vector<16x16xf32> to vector<16x15xf32>
    %68 = tpu.concatenate %66, %67 in 1 : vector<16x1xf32>, vector<16x15xf32> -> vector<16x16xf32>
    %69 = arith.maximumf %65, %68 : vector<16x16xf32>
    %70 = vector.extract_strided_slice %65 {offsets = [0, 1], sizes = [16, 15], strides = [1, 1]} : vector<16x16xf32> to vector<16x15xf32>
    %71 = vector.extract_strided_slice %65 {offsets = [0, 15], sizes = [16, 1], strides = [1, 1]} : vector<16x16xf32> to vector<16x1xf32>
    %72 = tpu.concatenate %70, %71 in 1 : vector<16x15xf32>, vector<16x1xf32> -> vector<16x16xf32>
    %73 = arith.maximumf %69, %72 : vector<16x16xf32>
    %74 = arith.subf %21, %73 : vector<16x16xf32>
    %cst_8 = arith.constant 0.000000e+00 : f32
    %75 = vector.broadcast %cst_8 : f32 to vector<16x16xf32>
    %76 = arith.maximumf %74, %75 : vector<16x16xf32>
    %77 = arith.mulf %40, %76 : vector<16x16xf32>
    %78 = arith.subf %76, %77 : vector<16x16xf32>
    %cst_9 = arith.constant 0.000000e+00 : f32
    %79 = vector.broadcast %cst_9 : f32 to vector<16x16xf32>
    %80 = arith.maximumf %78, %79 : vector<16x16xf32>
    %81 = arith.addf %40, %80 : vector<16x16xf32>
    %82 = vector.extract_strided_slice %57 {offsets = [0, 0], sizes = [1, 16], strides = [1, 1]} : vector<16x16xf32> to vector<1x16xf32>
    %83 = vector.extract_strided_slice %57 {offsets = [0, 0], sizes = [15, 16], strides = [1, 1]} : vector<16x16xf32> to vector<15x16xf32>
    %84 = tpu.concatenate %82, %83 in 0 : vector<1x16xf32>, vector<15x16xf32> -> vector<16x16xf32>
    %85 = arith.minimumf %57, %84 : vector<16x16xf32>
    %86 = vector.extract_strided_slice %57 {offsets = [1, 0], sizes = [15, 16], strides = [1, 1]} : vector<16x16xf32> to vector<15x16xf32>
    %87 = vector.extract_strided_slice %57 {offsets = [15, 0], sizes = [1, 16], strides = [1, 1]} : vector<16x16xf32> to vector<1x16xf32>
    %88 = tpu.concatenate %86, %87 in 0 : vector<15x16xf32>, vector<1x16xf32> -> vector<16x16xf32>
    %89 = arith.minimumf %85, %88 : vector<16x16xf32>
    %90 = vector.extract_strided_slice %57 {offsets = [0, 0], sizes = [16, 1], strides = [1, 1]} : vector<16x16xf32> to vector<16x1xf32>
    %91 = vector.extract_strided_slice %57 {offsets = [0, 0], sizes = [16, 15], strides = [1, 1]} : vector<16x16xf32> to vector<16x15xf32>
    %92 = tpu.concatenate %90, %91 in 1 : vector<16x1xf32>, vector<16x15xf32> -> vector<16x16xf32>
    %93 = arith.minimumf %57, %92 : vector<16x16xf32>
    %94 = vector.extract_strided_slice %57 {offsets = [0, 1], sizes = [16, 15], strides = [1, 1]} : vector<16x16xf32> to vector<16x15xf32>
    %95 = vector.extract_strided_slice %57 {offsets = [0, 15], sizes = [16, 1], strides = [1, 1]} : vector<16x16xf32> to vector<16x1xf32>
    %96 = tpu.concatenate %94, %95 in 1 : vector<16x15xf32>, vector<16x1xf32> -> vector<16x16xf32>
    %97 = arith.minimumf %93, %96 : vector<16x16xf32>
    %98 = arith.minimumf %89, %97 : vector<16x16xf32>
    %99 = vector.extract_strided_slice %98 {offsets = [0, 0], sizes = [1, 16], strides = [1, 1]} : vector<16x16xf32> to vector<1x16xf32>
    %100 = vector.extract_strided_slice %98 {offsets = [0, 0], sizes = [15, 16], strides = [1, 1]} : vector<16x16xf32> to vector<15x16xf32>
    %101 = tpu.concatenate %99, %100 in 0 : vector<1x16xf32>, vector<15x16xf32> -> vector<16x16xf32>
    %102 = arith.maximumf %98, %101 : vector<16x16xf32>
    %103 = vector.extract_strided_slice %98 {offsets = [1, 0], sizes = [15, 16], strides = [1, 1]} : vector<16x16xf32> to vector<15x16xf32>
    %104 = vector.extract_strided_slice %98 {offsets = [15, 0], sizes = [1, 16], strides = [1, 1]} : vector<16x16xf32> to vector<1x16xf32>
    %105 = tpu.concatenate %103, %104 in 0 : vector<15x16xf32>, vector<1x16xf32> -> vector<16x16xf32>
    %106 = arith.maximumf %102, %105 : vector<16x16xf32>
    %107 = vector.extract_strided_slice %106 {offsets = [0, 0], sizes = [16, 1], strides = [1, 1]} : vector<16x16xf32> to vector<16x1xf32>
    %108 = vector.extract_strided_slice %106 {offsets = [0, 0], sizes = [16, 15], strides = [1, 1]} : vector<16x16xf32> to vector<16x15xf32>
    %109 = tpu.concatenate %107, %108 in 1 : vector<16x1xf32>, vector<16x15xf32> -> vector<16x16xf32>
    %110 = arith.maximumf %106, %109 : vector<16x16xf32>
    %111 = vector.extract_strided_slice %106 {offsets = [0, 1], sizes = [16, 15], strides = [1, 1]} : vector<16x16xf32> to vector<16x15xf32>
    %112 = vector.extract_strided_slice %106 {offsets = [0, 15], sizes = [16, 1], strides = [1, 1]} : vector<16x16xf32> to vector<16x1xf32>
    %113 = tpu.concatenate %111, %112 in 1 : vector<16x15xf32>, vector<16x1xf32> -> vector<16x16xf32>
    %114 = arith.maximumf %110, %113 : vector<16x16xf32>
    %115 = arith.subf %57, %114 : vector<16x16xf32>
    %cst_10 = arith.constant 0.000000e+00 : f32
    %116 = vector.broadcast %cst_10 : f32 to vector<16x16xf32>
    %117 = arith.maximumf %115, %116 : vector<16x16xf32>
    %118 = arith.mulf %81, %117 : vector<16x16xf32>
    %119 = arith.subf %117, %118 : vector<16x16xf32>
    %cst_11 = arith.constant 0.000000e+00 : f32
    %120 = vector.broadcast %cst_11 : f32 to vector<16x16xf32>
    %121 = arith.maximumf %119, %120 : vector<16x16xf32>
    %122 = arith.addf %81, %121 : vector<16x16xf32>
    %123 = vector.extract_strided_slice %98 {offsets = [0, 0], sizes = [1, 16], strides = [1, 1]} : vector<16x16xf32> to vector<1x16xf32>
    %124 = vector.extract_strided_slice %98 {offsets = [0, 0], sizes = [15, 16], strides = [1, 1]} : vector<16x16xf32> to vector<15x16xf32>
    %125 = tpu.concatenate %123, %124 in 0 : vector<1x16xf32>, vector<15x16xf32> -> vector<16x16xf32>
    %126 = arith.minimumf %98, %125 : vector<16x16xf32>
    %127 = vector.extract_strided_slice %98 {offsets = [1, 0], sizes = [15, 16], strides = [1, 1]} : vector<16x16xf32> to vector<15x16xf32>
    %128 = vector.extract_strided_slice %98 {offsets = [15, 0], sizes = [1, 16], strides = [1, 1]} : vector<16x16xf32> to vector<1x16xf32>
    %129 = tpu.concatenate %127, %128 in 0 : vector<15x16xf32>, vector<1x16xf32> -> vector<16x16xf32>
    %130 = arith.minimumf %126, %129 : vector<16x16xf32>
    %131 = vector.extract_strided_slice %98 {offsets = [0, 0], sizes = [16, 1], strides = [1, 1]} : vector<16x16xf32> to vector<16x1xf32>
    %132 = vector.extract_strided_slice %98 {offsets = [0, 0], sizes = [16, 15], strides = [1, 1]} : vector<16x16xf32> to vector<16x15xf32>
    %133 = tpu.concatenate %131, %132 in 1 : vector<16x1xf32>, vector<16x15xf32> -> vector<16x16xf32>
    %134 = arith.minimumf %98, %133 : vector<16x16xf32>
    %135 = vector.extract_strided_slice %98 {offsets = [0, 1], sizes = [16, 15], strides = [1, 1]} : vector<16x16xf32> to vector<16x15xf32>
    %136 = vector.extract_strided_slice %98 {offsets = [0, 15], sizes = [16, 1], strides = [1, 1]} : vector<16x16xf32> to vector<16x1xf32>
    %137 = tpu.concatenate %135, %136 in 1 : vector<16x15xf32>, vector<16x1xf32> -> vector<16x16xf32>
    %138 = arith.minimumf %134, %137 : vector<16x16xf32>
    %139 = arith.minimumf %130, %138 : vector<16x16xf32>
    %140 = vector.extract_strided_slice %139 {offsets = [0, 0], sizes = [1, 16], strides = [1, 1]} : vector<16x16xf32> to vector<1x16xf32>
    %141 = vector.extract_strided_slice %139 {offsets = [0, 0], sizes = [15, 16], strides = [1, 1]} : vector<16x16xf32> to vector<15x16xf32>
    %142 = tpu.concatenate %140, %141 in 0 : vector<1x16xf32>, vector<15x16xf32> -> vector<16x16xf32>
    %143 = arith.maximumf %139, %142 : vector<16x16xf32>
    %144 = vector.extract_strided_slice %139 {offsets = [1, 0], sizes = [15, 16], strides = [1, 1]} : vector<16x16xf32> to vector<15x16xf32>
    %145 = vector.extract_strided_slice %139 {offsets = [15, 0], sizes = [1, 16], strides = [1, 1]} : vector<16x16xf32> to vector<1x16xf32>
    %146 = tpu.concatenate %144, %145 in 0 : vector<15x16xf32>, vector<1x16xf32> -> vector<16x16xf32>
    %147 = arith.maximumf %143, %146 : vector<16x16xf32>
    %148 = vector.extract_strided_slice %147 {offsets = [0, 0], sizes = [16, 1], strides = [1, 1]} : vector<16x16xf32> to vector<16x1xf32>
    %149 = vector.extract_strided_slice %147 {offsets = [0, 0], sizes = [16, 15], strides = [1, 1]} : vector<16x16xf32> to vector<16x15xf32>
    %150 = tpu.concatenate %148, %149 in 1 : vector<16x1xf32>, vector<16x15xf32> -> vector<16x16xf32>
    %151 = arith.maximumf %147, %150 : vector<16x16xf32>
    %152 = vector.extract_strided_slice %147 {offsets = [0, 1], sizes = [16, 15], strides = [1, 1]} : vector<16x16xf32> to vector<16x15xf32>
    %153 = vector.extract_strided_slice %147 {offsets = [0, 15], sizes = [16, 1], strides = [1, 1]} : vector<16x16xf32> to vector<16x1xf32>
    %154 = tpu.concatenate %152, %153 in 1 : vector<16x15xf32>, vector<16x1xf32> -> vector<16x16xf32>
    %155 = arith.maximumf %151, %154 : vector<16x16xf32>
    %156 = arith.subf %98, %155 : vector<16x16xf32>
    %cst_12 = arith.constant 0.000000e+00 : f32
    %157 = vector.broadcast %cst_12 : f32 to vector<16x16xf32>
    %158 = arith.maximumf %156, %157 : vector<16x16xf32>
    %159 = arith.mulf %122, %158 : vector<16x16xf32>
    %160 = arith.subf %158, %159 : vector<16x16xf32>
    %cst_13 = arith.constant 0.000000e+00 : f32
    %161 = vector.broadcast %cst_13 : f32 to vector<16x16xf32>
    %162 = arith.maximumf %160, %161 : vector<16x16xf32>
    %163 = arith.addf %122, %162 : vector<16x16xf32>
    %164 = vector.extract_strided_slice %1 {offsets = [0, 0], sizes = [1, 16], strides = [1, 1]} : vector<16x16xf32> to vector<1x16xf32>
    %165 = vector.extract_strided_slice %1 {offsets = [0, 0], sizes = [15, 16], strides = [1, 1]} : vector<16x16xf32> to vector<15x16xf32>
    %166 = tpu.concatenate %164, %165 in 0 : vector<1x16xf32>, vector<15x16xf32> -> vector<16x16xf32>
    %167 = arith.minimumf %1, %166 : vector<16x16xf32>
    %168 = vector.extract_strided_slice %1 {offsets = [1, 0], sizes = [15, 16], strides = [1, 1]} : vector<16x16xf32> to vector<15x16xf32>
    %169 = vector.extract_strided_slice %1 {offsets = [15, 0], sizes = [1, 16], strides = [1, 1]} : vector<16x16xf32> to vector<1x16xf32>
    %170 = tpu.concatenate %168, %169 in 0 : vector<15x16xf32>, vector<1x16xf32> -> vector<16x16xf32>
    %171 = arith.minimumf %167, %170 : vector<16x16xf32>
    %172 = vector.extract_strided_slice %1 {offsets = [0, 0], sizes = [16, 1], strides = [1, 1]} : vector<16x16xf32> to vector<16x1xf32>
    %173 = vector.extract_strided_slice %1 {offsets = [0, 0], sizes = [16, 15], strides = [1, 1]} : vector<16x16xf32> to vector<16x15xf32>
    %174 = tpu.concatenate %172, %173 in 1 : vector<16x1xf32>, vector<16x15xf32> -> vector<16x16xf32>
    %175 = arith.minimumf %1, %174 : vector<16x16xf32>
    %176 = vector.extract_strided_slice %1 {offsets = [0, 1], sizes = [16, 15], strides = [1, 1]} : vector<16x16xf32> to vector<16x15xf32>
    %177 = vector.extract_strided_slice %1 {offsets = [0, 15], sizes = [16, 1], strides = [1, 1]} : vector<16x16xf32> to vector<16x1xf32>
    %178 = tpu.concatenate %176, %177 in 1 : vector<16x15xf32>, vector<16x1xf32> -> vector<16x16xf32>
    %179 = arith.minimumf %175, %178 : vector<16x16xf32>
    %180 = arith.minimumf %171, %179 : vector<16x16xf32>
    %181 = vector.extract_strided_slice %180 {offsets = [0, 0], sizes = [1, 16], strides = [1, 1]} : vector<16x16xf32> to vector<1x16xf32>
    %182 = vector.extract_strided_slice %180 {offsets = [0, 0], sizes = [15, 16], strides = [1, 1]} : vector<16x16xf32> to vector<15x16xf32>
    %183 = tpu.concatenate %181, %182 in 0 : vector<1x16xf32>, vector<15x16xf32> -> vector<16x16xf32>
    %184 = arith.maximumf %180, %183 : vector<16x16xf32>
    %185 = vector.extract_strided_slice %180 {offsets = [1, 0], sizes = [15, 16], strides = [1, 1]} : vector<16x16xf32> to vector<15x16xf32>
    %186 = vector.extract_strided_slice %180 {offsets = [15, 0], sizes = [1, 16], strides = [1, 1]} : vector<16x16xf32> to vector<1x16xf32>
    %187 = tpu.concatenate %185, %186 in 0 : vector<15x16xf32>, vector<1x16xf32> -> vector<16x16xf32>
    %188 = arith.maximumf %184, %187 : vector<16x16xf32>
    %189 = vector.extract_strided_slice %188 {offsets = [0, 0], sizes = [16, 1], strides = [1, 1]} : vector<16x16xf32> to vector<16x1xf32>
    %190 = vector.extract_strided_slice %188 {offsets = [0, 0], sizes = [16, 15], strides = [1, 1]} : vector<16x16xf32> to vector<16x15xf32>
    %191 = tpu.concatenate %189, %190 in 1 : vector<16x1xf32>, vector<16x15xf32> -> vector<16x16xf32>
    %192 = arith.maximumf %188, %191 : vector<16x16xf32>
    %193 = vector.extract_strided_slice %188 {offsets = [0, 1], sizes = [16, 15], strides = [1, 1]} : vector<16x16xf32> to vector<16x15xf32>
    %194 = vector.extract_strided_slice %188 {offsets = [0, 15], sizes = [16, 1], strides = [1, 1]} : vector<16x16xf32> to vector<16x1xf32>
    %195 = tpu.concatenate %193, %194 in 1 : vector<16x15xf32>, vector<16x1xf32> -> vector<16x16xf32>
    %196 = arith.maximumf %192, %195 : vector<16x16xf32>
    %197 = arith.subf %1, %196 : vector<16x16xf32>
    %cst_14 = arith.constant 0.000000e+00 : f32
    %198 = vector.broadcast %cst_14 : f32 to vector<16x16xf32>
    %199 = arith.maximumf %197, %198 : vector<16x16xf32>
    %200 = vector.extract_strided_slice %180 {offsets = [0, 0], sizes = [1, 16], strides = [1, 1]} : vector<16x16xf32> to vector<1x16xf32>
    %201 = vector.extract_strided_slice %180 {offsets = [0, 0], sizes = [15, 16], strides = [1, 1]} : vector<16x16xf32> to vector<15x16xf32>
    %202 = tpu.concatenate %200, %201 in 0 : vector<1x16xf32>, vector<15x16xf32> -> vector<16x16xf32>
    %203 = arith.minimumf %180, %202 : vector<16x16xf32>
    %204 = vector.extract_strided_slice %180 {offsets = [1, 0], sizes = [15, 16], strides = [1, 1]} : vector<16x16xf32> to vector<15x16xf32>
    %205 = vector.extract_strided_slice %180 {offsets = [15, 0], sizes = [1, 16], strides = [1, 1]} : vector<16x16xf32> to vector<1x16xf32>
    %206 = tpu.concatenate %204, %205 in 0 : vector<15x16xf32>, vector<1x16xf32> -> vector<16x16xf32>
    %207 = arith.minimumf %203, %206 : vector<16x16xf32>
    %208 = vector.extract_strided_slice %180 {offsets = [0, 0], sizes = [16, 1], strides = [1, 1]} : vector<16x16xf32> to vector<16x1xf32>
    %209 = vector.extract_strided_slice %180 {offsets = [0, 0], sizes = [16, 15], strides = [1, 1]} : vector<16x16xf32> to vector<16x15xf32>
    %210 = tpu.concatenate %208, %209 in 1 : vector<16x1xf32>, vector<16x15xf32> -> vector<16x16xf32>
    %211 = arith.minimumf %180, %210 : vector<16x16xf32>
    %212 = vector.extract_strided_slice %180 {offsets = [0, 1], sizes = [16, 15], strides = [1, 1]} : vector<16x16xf32> to vector<16x15xf32>
    %213 = vector.extract_strided_slice %180 {offsets = [0, 15], sizes = [16, 1], strides = [1, 1]} : vector<16x16xf32> to vector<16x1xf32>
    %214 = tpu.concatenate %212, %213 in 1 : vector<16x15xf32>, vector<16x1xf32> -> vector<16x16xf32>
    %215 = arith.minimumf %211, %214 : vector<16x16xf32>
    %216 = arith.minimumf %207, %215 : vector<16x16xf32>
    %217 = vector.extract_strided_slice %216 {offsets = [0, 0], sizes = [1, 16], strides = [1, 1]} : vector<16x16xf32> to vector<1x16xf32>
    %218 = vector.extract_strided_slice %216 {offsets = [0, 0], sizes = [15, 16], strides = [1, 1]} : vector<16x16xf32> to vector<15x16xf32>
    %219 = tpu.concatenate %217, %218 in 0 : vector<1x16xf32>, vector<15x16xf32> -> vector<16x16xf32>
    %220 = arith.maximumf %216, %219 : vector<16x16xf32>
    %221 = vector.extract_strided_slice %216 {offsets = [1, 0], sizes = [15, 16], strides = [1, 1]} : vector<16x16xf32> to vector<15x16xf32>
    %222 = vector.extract_strided_slice %216 {offsets = [15, 0], sizes = [1, 16], strides = [1, 1]} : vector<16x16xf32> to vector<1x16xf32>
    %223 = tpu.concatenate %221, %222 in 0 : vector<15x16xf32>, vector<1x16xf32> -> vector<16x16xf32>
    %224 = arith.maximumf %220, %223 : vector<16x16xf32>
    %225 = vector.extract_strided_slice %224 {offsets = [0, 0], sizes = [16, 1], strides = [1, 1]} : vector<16x16xf32> to vector<16x1xf32>
    %226 = vector.extract_strided_slice %224 {offsets = [0, 0], sizes = [16, 15], strides = [1, 1]} : vector<16x16xf32> to vector<16x15xf32>
    %227 = tpu.concatenate %225, %226 in 1 : vector<16x1xf32>, vector<16x15xf32> -> vector<16x16xf32>
    %228 = arith.maximumf %224, %227 : vector<16x16xf32>
    %229 = vector.extract_strided_slice %224 {offsets = [0, 1], sizes = [16, 15], strides = [1, 1]} : vector<16x16xf32> to vector<16x15xf32>
    %230 = vector.extract_strided_slice %224 {offsets = [0, 15], sizes = [16, 1], strides = [1, 1]} : vector<16x16xf32> to vector<16x1xf32>
    %231 = tpu.concatenate %229, %230 in 1 : vector<16x15xf32>, vector<16x1xf32> -> vector<16x16xf32>
    %232 = arith.maximumf %228, %231 : vector<16x16xf32>
    %233 = arith.subf %180, %232 : vector<16x16xf32>
    %cst_15 = arith.constant 0.000000e+00 : f32
    %234 = vector.broadcast %cst_15 : f32 to vector<16x16xf32>
    %235 = arith.maximumf %233, %234 : vector<16x16xf32>
    %236 = arith.mulf %199, %235 : vector<16x16xf32>
    %237 = arith.subf %235, %236 : vector<16x16xf32>
    %cst_16 = arith.constant 0.000000e+00 : f32
    %238 = vector.broadcast %cst_16 : f32 to vector<16x16xf32>
    %239 = arith.maximumf %237, %238 : vector<16x16xf32>
    %240 = arith.addf %199, %239 : vector<16x16xf32>
    %241 = vector.extract_strided_slice %216 {offsets = [0, 0], sizes = [1, 16], strides = [1, 1]} : vector<16x16xf32> to vector<1x16xf32>
    %242 = vector.extract_strided_slice %216 {offsets = [0, 0], sizes = [15, 16], strides = [1, 1]} : vector<16x16xf32> to vector<15x16xf32>
    %243 = tpu.concatenate %241, %242 in 0 : vector<1x16xf32>, vector<15x16xf32> -> vector<16x16xf32>
    %244 = arith.minimumf %216, %243 : vector<16x16xf32>
    %245 = vector.extract_strided_slice %216 {offsets = [1, 0], sizes = [15, 16], strides = [1, 1]} : vector<16x16xf32> to vector<15x16xf32>
    %246 = vector.extract_strided_slice %216 {offsets = [15, 0], sizes = [1, 16], strides = [1, 1]} : vector<16x16xf32> to vector<1x16xf32>
    %247 = tpu.concatenate %245, %246 in 0 : vector<15x16xf32>, vector<1x16xf32> -> vector<16x16xf32>
    %248 = arith.minimumf %244, %247 : vector<16x16xf32>
    %249 = vector.extract_strided_slice %216 {offsets = [0, 0], sizes = [16, 1], strides = [1, 1]} : vector<16x16xf32> to vector<16x1xf32>
    %250 = vector.extract_strided_slice %216 {offsets = [0, 0], sizes = [16, 15], strides = [1, 1]} : vector<16x16xf32> to vector<16x15xf32>
    %251 = tpu.concatenate %249, %250 in 1 : vector<16x1xf32>, vector<16x15xf32> -> vector<16x16xf32>
    %252 = arith.minimumf %216, %251 : vector<16x16xf32>
    %253 = vector.extract_strided_slice %216 {offsets = [0, 1], sizes = [16, 15], strides = [1, 1]} : vector<16x16xf32> to vector<16x15xf32>
    %254 = vector.extract_strided_slice %216 {offsets = [0, 15], sizes = [16, 1], strides = [1, 1]} : vector<16x16xf32> to vector<16x1xf32>
    %255 = tpu.concatenate %253, %254 in 1 : vector<16x15xf32>, vector<16x1xf32> -> vector<16x16xf32>
    %256 = arith.minimumf %252, %255 : vector<16x16xf32>
    %257 = arith.minimumf %248, %256 : vector<16x16xf32>
    %258 = vector.extract_strided_slice %257 {offsets = [0, 0], sizes = [1, 16], strides = [1, 1]} : vector<16x16xf32> to vector<1x16xf32>
    %259 = vector.extract_strided_slice %257 {offsets = [0, 0], sizes = [15, 16], strides = [1, 1]} : vector<16x16xf32> to vector<15x16xf32>
    %260 = tpu.concatenate %258, %259 in 0 : vector<1x16xf32>, vector<15x16xf32> -> vector<16x16xf32>
    %261 = arith.maximumf %257, %260 : vector<16x16xf32>
    %262 = vector.extract_strided_slice %257 {offsets = [1, 0], sizes = [15, 16], strides = [1, 1]} : vector<16x16xf32> to vector<15x16xf32>
    %263 = vector.extract_strided_slice %257 {offsets = [15, 0], sizes = [1, 16], strides = [1, 1]} : vector<16x16xf32> to vector<1x16xf32>
    %264 = tpu.concatenate %262, %263 in 0 : vector<15x16xf32>, vector<1x16xf32> -> vector<16x16xf32>
    %265 = arith.maximumf %261, %264 : vector<16x16xf32>
    %266 = vector.extract_strided_slice %265 {offsets = [0, 0], sizes = [16, 1], strides = [1, 1]} : vector<16x16xf32> to vector<16x1xf32>
    %267 = vector.extract_strided_slice %265 {offsets = [0, 0], sizes = [16, 15], strides = [1, 1]} : vector<16x16xf32> to vector<16x15xf32>
    %268 = tpu.concatenate %266, %267 in 1 : vector<16x1xf32>, vector<16x15xf32> -> vector<16x16xf32>
    %269 = arith.maximumf %265, %268 : vector<16x16xf32>
    %270 = vector.extract_strided_slice %265 {offsets = [0, 1], sizes = [16, 15], strides = [1, 1]} : vector<16x16xf32> to vector<16x15xf32>
    %271 = vector.extract_strided_slice %265 {offsets = [0, 15], sizes = [16, 1], strides = [1, 1]} : vector<16x16xf32> to vector<16x1xf32>
    %272 = tpu.concatenate %270, %271 in 1 : vector<16x15xf32>, vector<16x1xf32> -> vector<16x16xf32>
    %273 = arith.maximumf %269, %272 : vector<16x16xf32>
    %274 = arith.subf %216, %273 : vector<16x16xf32>
    %cst_17 = arith.constant 0.000000e+00 : f32
    %275 = vector.broadcast %cst_17 : f32 to vector<16x16xf32>
    %276 = arith.maximumf %274, %275 : vector<16x16xf32>
    %277 = arith.mulf %240, %276 : vector<16x16xf32>
    %278 = arith.subf %276, %277 : vector<16x16xf32>
    %cst_18 = arith.constant 0.000000e+00 : f32
    %279 = vector.broadcast %cst_18 : f32 to vector<16x16xf32>
    %280 = arith.maximumf %278, %279 : vector<16x16xf32>
    %281 = arith.addf %240, %280 : vector<16x16xf32>
    %282 = vector.extract_strided_slice %257 {offsets = [0, 0], sizes = [1, 16], strides = [1, 1]} : vector<16x16xf32> to vector<1x16xf32>
    %283 = vector.extract_strided_slice %257 {offsets = [0, 0], sizes = [15, 16], strides = [1, 1]} : vector<16x16xf32> to vector<15x16xf32>
    %284 = tpu.concatenate %282, %283 in 0 : vector<1x16xf32>, vector<15x16xf32> -> vector<16x16xf32>
    %285 = arith.minimumf %257, %284 : vector<16x16xf32>
    %286 = vector.extract_strided_slice %257 {offsets = [1, 0], sizes = [15, 16], strides = [1, 1]} : vector<16x16xf32> to vector<15x16xf32>
    %287 = vector.extract_strided_slice %257 {offsets = [15, 0], sizes = [1, 16], strides = [1, 1]} : vector<16x16xf32> to vector<1x16xf32>
    %288 = tpu.concatenate %286, %287 in 0 : vector<15x16xf32>, vector<1x16xf32> -> vector<16x16xf32>
    %289 = arith.minimumf %285, %288 : vector<16x16xf32>
    %290 = vector.extract_strided_slice %257 {offsets = [0, 0], sizes = [16, 1], strides = [1, 1]} : vector<16x16xf32> to vector<16x1xf32>
    %291 = vector.extract_strided_slice %257 {offsets = [0, 0], sizes = [16, 15], strides = [1, 1]} : vector<16x16xf32> to vector<16x15xf32>
    %292 = tpu.concatenate %290, %291 in 1 : vector<16x1xf32>, vector<16x15xf32> -> vector<16x16xf32>
    %293 = arith.minimumf %257, %292 : vector<16x16xf32>
    %294 = vector.extract_strided_slice %257 {offsets = [0, 1], sizes = [16, 15], strides = [1, 1]} : vector<16x16xf32> to vector<16x15xf32>
    %295 = vector.extract_strided_slice %257 {offsets = [0, 15], sizes = [16, 1], strides = [1, 1]} : vector<16x16xf32> to vector<16x1xf32>
    %296 = tpu.concatenate %294, %295 in 1 : vector<16x15xf32>, vector<16x1xf32> -> vector<16x16xf32>
    %297 = arith.minimumf %293, %296 : vector<16x16xf32>
    %298 = arith.minimumf %289, %297 : vector<16x16xf32>
    %299 = vector.extract_strided_slice %298 {offsets = [0, 0], sizes = [1, 16], strides = [1, 1]} : vector<16x16xf32> to vector<1x16xf32>
    %300 = vector.extract_strided_slice %298 {offsets = [0, 0], sizes = [15, 16], strides = [1, 1]} : vector<16x16xf32> to vector<15x16xf32>
    %301 = tpu.concatenate %299, %300 in 0 : vector<1x16xf32>, vector<15x16xf32> -> vector<16x16xf32>
    %302 = arith.maximumf %298, %301 : vector<16x16xf32>
    %303 = vector.extract_strided_slice %298 {offsets = [1, 0], sizes = [15, 16], strides = [1, 1]} : vector<16x16xf32> to vector<15x16xf32>
    %304 = vector.extract_strided_slice %298 {offsets = [15, 0], sizes = [1, 16], strides = [1, 1]} : vector<16x16xf32> to vector<1x16xf32>
    %305 = tpu.concatenate %303, %304 in 0 : vector<15x16xf32>, vector<1x16xf32> -> vector<16x16xf32>
    %306 = arith.maximumf %302, %305 : vector<16x16xf32>
    %307 = vector.extract_strided_slice %306 {offsets = [0, 0], sizes = [16, 1], strides = [1, 1]} : vector<16x16xf32> to vector<16x1xf32>
    %308 = vector.extract_strided_slice %306 {offsets = [0, 0], sizes = [16, 15], strides = [1, 1]} : vector<16x16xf32> to vector<16x15xf32>
    %309 = tpu.concatenate %307, %308 in 1 : vector<16x1xf32>, vector<16x15xf32> -> vector<16x16xf32>
    %310 = arith.maximumf %306, %309 : vector<16x16xf32>
    %311 = vector.extract_strided_slice %306 {offsets = [0, 1], sizes = [16, 15], strides = [1, 1]} : vector<16x16xf32> to vector<16x15xf32>
    %312 = vector.extract_strided_slice %306 {offsets = [0, 15], sizes = [16, 1], strides = [1, 1]} : vector<16x16xf32> to vector<16x1xf32>
    %313 = tpu.concatenate %311, %312 in 1 : vector<16x15xf32>, vector<16x1xf32> -> vector<16x16xf32>
    %314 = arith.maximumf %310, %313 : vector<16x16xf32>
    %315 = arith.subf %257, %314 : vector<16x16xf32>
    %cst_19 = arith.constant 0.000000e+00 : f32
    %316 = vector.broadcast %cst_19 : f32 to vector<16x16xf32>
    %317 = arith.maximumf %315, %316 : vector<16x16xf32>
    %318 = arith.mulf %281, %317 : vector<16x16xf32>
    %319 = arith.subf %317, %318 : vector<16x16xf32>
    %cst_20 = arith.constant 0.000000e+00 : f32
    %320 = vector.broadcast %cst_20 : f32 to vector<16x16xf32>
    %321 = arith.maximumf %319, %320 : vector<16x16xf32>
    %322 = arith.addf %281, %321 : vector<16x16xf32>
    %323 = arith.mulf %163, %1 : vector<16x16xf32>
    %cst_21 = arith.constant dense<0.000000e+00> : vector<1x16xf32>
    %324 = tpu.matmul %4, %323, %cst_21 {dimension_numbers = #tpu.dot_dimension_numbers<[1], [0], [0], [1], [0, 0, 1, 1], [], []>} : vector<1x16xf32>, vector<16x16xf32>, vector<1x16xf32> -> vector<1x16xf32>
    %325 = vector.shape_cast %324 : vector<1x16xf32> to vector<1x1x16xf32>
    %cst_22 = arith.constant dense<0.000000e+00> : vector<1xf32>
    %326 = vector.multi_reduction <add>, %325, %cst_22 [1, 2] : vector<1x1x16xf32> to vector<1xf32>
    %327 = vector.shape_cast %326 : vector<1xf32> to vector<1x1x1xf32>
    %328 = vector.extract %327[0, 0, 0] : f32 from vector<1x1x1xf32>
    %cst_23 = arith.constant dense<0.000000e+00> : vector<1x16xf32>
    %329 = tpu.matmul %4, %163, %cst_23 {dimension_numbers = #tpu.dot_dimension_numbers<[1], [0], [0], [1], [0, 0, 1, 1], [], []>} : vector<1x16xf32>, vector<16x16xf32>, vector<1x16xf32> -> vector<1x16xf32>
    %330 = vector.shape_cast %329 : vector<1x16xf32> to vector<1x1x16xf32>
    %cst_24 = arith.constant dense<0.000000e+00> : vector<1xf32>
    %331 = vector.multi_reduction <add>, %330, %cst_24 [1, 2] : vector<1x1x16xf32> to vector<1xf32>
    %332 = vector.shape_cast %331 : vector<1xf32> to vector<1x1x1xf32>
    %333 = vector.extract %332[0, 0, 0] : f32 from vector<1x1x1xf32>
    %334 = arith.mulf %322, %3 : vector<16x16xf32>
    %cst_25 = arith.constant dense<0.000000e+00> : vector<1x16xf32>
    %335 = tpu.matmul %4, %334, %cst_25 {dimension_numbers = #tpu.dot_dimension_numbers<[1], [0], [0], [1], [0, 0, 1, 1], [], []>} : vector<1x16xf32>, vector<16x16xf32>, vector<1x16xf32> -> vector<1x16xf32>
    %336 = vector.shape_cast %335 : vector<1x16xf32> to vector<1x1x16xf32>
    %cst_26 = arith.constant dense<0.000000e+00> : vector<1xf32>
    %337 = vector.multi_reduction <add>, %336, %cst_26 [1, 2] : vector<1x1x16xf32> to vector<1xf32>
    %338 = vector.shape_cast %337 : vector<1xf32> to vector<1x1x1xf32>
    %339 = vector.extract %338[0, 0, 0] : f32 from vector<1x1x1xf32>
    %cst_27 = arith.constant dense<0.000000e+00> : vector<1x16xf32>
    %340 = tpu.matmul %4, %322, %cst_27 {dimension_numbers = #tpu.dot_dimension_numbers<[1], [0], [0], [1], [0, 0, 1, 1], [], []>} : vector<1x16xf32>, vector<16x16xf32>, vector<1x16xf32> -> vector<1x16xf32>
    %341 = vector.shape_cast %340 : vector<1x16xf32> to vector<1x1x16xf32>
    %cst_28 = arith.constant dense<0.000000e+00> : vector<1xf32>
    %342 = vector.multi_reduction <add>, %341, %cst_28 [1, 2] : vector<1x1x16xf32> to vector<1xf32>
    %343 = vector.shape_cast %342 : vector<1xf32> to vector<1x1x1xf32>
    %344 = vector.extract %343[0, 0, 0] : f32 from vector<1x1x1xf32>
    %345 = vector.broadcast %328 : f32 to vector<1x1x8x128xf32>
    %c0_29 = arith.constant 0 : index
    %c0_30 = arith.constant 0 : index
    %c0_31 = arith.constant 0 : index
    %c0_32 = arith.constant 0 : index
    %346 = vector.load %arg4[%c0_29, %c0_30, %c0_31, %c0_32] : memref<1x1x8x128xf32, #tpu.memory_space<vmem>>, vector<1x1x8x128xf32>
    tpu.vector_store %arg4[%c0_29, %c0_30, %c0_31, %c0_32], %345 {strides = array<i32>} : memref<1x1x8x128xf32, #tpu.memory_space<vmem>>, vector<1x1x8x128xf32>,
    %347 = vector.broadcast %333 : f32 to vector<1x1x8x128xf32>
    %c0_33 = arith.constant 0 : index
    %c0_34 = arith.constant 0 : index
    %c0_35 = arith.constant 0 : index
    %c0_36 = arith.constant 0 : index
    %348 = vector.load %arg5[%c0_33, %c0_34, %c0_35, %c0_36] : memref<1x1x8x128xf32, #tpu.memory_space<vmem>>, vector<1x1x8x128xf32>
    tpu.vector_store %arg5[%c0_33, %c0_34, %c0_35, %c0_36], %347 {strides = array<i32>} : memref<1x1x8x128xf32, #tpu.memory_space<vmem>>, vector<1x1x8x128xf32>,
    %349 = vector.broadcast %339 : f32 to vector<1x1x8x128xf32>
    %c0_37 = arith.constant 0 : index
    %c0_38 = arith.constant 0 : index
    %c0_39 = arith.constant 0 : index
    %c0_40 = arith.constant 0 : index
    %350 = vector.load %arg6[%c0_37, %c0_38, %c0_39, %c0_40] : memref<1x1x8x128xf32, #tpu.memory_space<vmem>>, vector<1x1x8x128xf32>
    tpu.vector_store %arg6[%c0_37, %c0_38, %c0_39, %c0_40], %349 {strides = array<i32>} : memref<1x1x8x128xf32, #tpu.memory_space<vmem>>, vector<1x1x8x128xf32>,
    %351 = vector.broadcast %344 : f32 to vector<1x1x8x128xf32>
    %c0_41 = arith.constant 0 : index
    %c0_42 = arith.constant 0 : index
    %c0_43 = arith.constant 0 : index
    %c0_44 = arith.constant 0 : index
    %352 = vector.load %arg7[%c0_41, %c0_42, %c0_43, %c0_44] : memref<1x1x8x128xf32, #tpu.memory_space<vmem>>, vector<1x1x8x128xf32>
    tpu.vector_store %arg7[%c0_41, %c0_42, %c0_43, %c0_44], %351 {strides = array<i32>} : memref<1x1x8x128xf32, #tpu.memory_space<vmem>>, vector<1x1x8x128xf32>,
    return
  }
  func.func @transform_0(%arg0: i32, %arg1: i32) -> (i32, i32, i32, i32) {
    %c1_i32 = arith.constant 1 : i32
    %0 = arith.addi %arg1, %c1_i32 : i32
    %c0_i32 = arith.constant 0 : i32
    %c0_i32_0 = arith.constant 0 : i32
    %c0_i32_1 = arith.constant 0 : i32
    return %arg0, %0, %c0_i32, %c0_i32_0 : i32, i32, i32, i32
  }
  func.func @transform_1(%arg0: i32, %arg1: i32) -> (i32, i32, i32, i32) {
    %c1_i32 = arith.constant 1 : i32
    %0 = arith.addi %arg1, %c1_i32 : i32
    %c0_i32 = arith.constant 0 : i32
    %c0_i32_0 = arith.constant 0 : i32
    %c0_i32_1 = arith.constant 0 : i32
    return %arg0, %0, %c0_i32, %c0_i32_0 : i32, i32, i32, i32
  }
  func.func @transform_2(%arg0: i32, %arg1: i32) -> (i32, i32, i32, i32) {
    %c0_i32 = arith.constant 0 : i32
    %c0_i32_0 = arith.constant 0 : i32
    %c0_i32_1 = arith.constant 0 : i32
    return %arg0, %arg1, %c0_i32, %c0_i32_0 : i32, i32, i32, i32
  }
  func.func @transform_3(%arg0: i32, %arg1: i32) -> (i32, i32, i32, i32) {
    %c0_i32 = arith.constant 0 : i32
    %c0_i32_0 = arith.constant 0 : i32
    %c0_i32_1 = arith.constant 0 : i32
    return %arg0, %arg1, %c0_i32, %c0_i32_0 : i32, i32, i32, i32
  }
  func.func @transform_4(%arg0: i32, %arg1: i32) -> (i32, i32, i32, i32) {
    %c0_i32 = arith.constant 0 : i32
    %c0_i32_0 = arith.constant 0 : i32
    %c0_i32_1 = arith.constant 0 : i32
    return %arg0, %arg1, %c0_i32, %c0_i32_0 : i32, i32, i32, i32
  }
  func.func @transform_5(%arg0: i32, %arg1: i32) -> (i32, i32, i32, i32) {
    %c0_i32 = arith.constant 0 : i32
    %c0_i32_0 = arith.constant 0 : i32
    %c0_i32_1 = arith.constant 0 : i32
    return %arg0, %arg1, %c0_i32, %c0_i32_0 : i32, i32, i32, i32
  }
}

</mosaic_0001>

<llo_original>
// kernel: tpu_custom_call.1
$region0: #{tpu_custom_call.1}
  #allocation0 [shape = 'u32[]', space=smem, size = 0x4, offset = 0x4, fixed_abs, tag = 'smem constant byte address 0x4 - core index']
  #allocation1 [shape = 'u32[144,128]{1,0:T(1,128)}', space=vmem, size = 0x12000, scoped, tag = 'internal scratch']
  %s0 = inlined_call_operand.hbm [shape: f32[2,4,16,16], index: 0, kind: input, shape index: {}]
  %s1 = inlined_call_operand.hbm [shape: f32[2,4,16,16], index: 1, kind: input, shape index: {}]
  %s2 = inlined_call_operand.hbm [shape: f32[2,3,8,128], index: 2, kind: output, shape index: {0}]
  %s3 = inlined_call_operand.hbm [shape: f32[2,3,8,128], index: 3, kind: output, shape index: {1}]
  %s4 = inlined_call_operand.hbm [shape: f32[2,3,8,128], index: 4, kind: output, shape index: {2}]
  %s5 = inlined_call_operand.hbm [shape: f32[2,3,8,128], index: 5, kind: output, shape index: {3}]
  %6 = xla_tuple %s2, %s3, %s4, %s5
  %s7 = sld [smem:[#allocation0]]
  $region73: #{tpu_custom_call.1} parent=0
    _
  %s9 = ssub.s32 1, %s7
  %s10 = scalar_select 0, %s9, %s7
  $region1: #{tpu_custom_call.1} parent=0
    #allocation2 [shape = 'u8[16384]{0}', space=vmem, size = 0x4000, scoped, tag = 'input window, operand 0']
    #allocation3 [shape = 's32[2]{0}', space=sflag, size = 0x8, scoped, tag = 'scoped memory for tpu_custom_call.1']
    #allocation4 [shape = 's32[2]{0}', space=sflag, size = 0x8, scoped, tag = 'scoped memory for tpu_custom_call.1']
    #allocation5 [shape = 'u8[16384]{0}', space=vmem, size = 0x4000, scoped, tag = 'input window, operand 1']
    #allocation6 [shape = 's32[2]{0}', space=sflag, size = 0x8, scoped, tag = 'scoped memory for tpu_custom_call.1']
    #allocation7 [shape = 'u8[8192]{0}', space=vmem, size = 0x2000, scoped, tag = 'output window, operand 0']
    #allocation8 [shape = 'u8[8192]{0}', space=vmem, size = 0x2000, scoped, tag = 'output window, operand 1']
    #allocation9 [shape = 's32[2]{0}', space=sflag, size = 0x8, scoped, tag = 'scoped memory for tpu_custom_call.1']
    #allocation10 [shape = 'u8[8192]{0}', space=vmem, size = 0x2000, scoped, tag = 'output window, operand 2']
    #allocation11 [shape = 'u8[8192]{0}', space=vmem, size = 0x2000, scoped, tag = 'output window, operand 3']
    #allocation12 [shape = 's32[2]{0}', space=sflag, size = 0x8, scoped, tag = 'scoped memory for tpu_custom_call.1']
    %11 = vsyncpa [#allocation3], 0
    %s12 = scalar_lea.sflag [#allocation3], 1
    %13 = vsyncpa %s12, 0
    %14 = vsyncpa [#allocation6], 0
    %s15 = scalar_lea.sflag [#allocation6], 1
    %16 = vsyncpa %s15, 0
    %17 = vsyncpa [#allocation4], 0
    %s18 = scalar_lea.sflag [#allocation4], 1
    %19 = vsyncpa %s18, 0
    %20 = vsyncpa [#allocation9], 0
    %s21 = scalar_lea.sflag [#allocation9], 1
    %22 = vsyncpa %s21, 0
    %23 = vsyncpa [#allocation12], 0
    %s24 = scalar_lea.sflag [#allocation12], 1
    %25 = vsyncpa %s24, 0
    loop: start=0, step=1, limit=8
    $region2: #{tpu_custom_call.1} parent=1 // loop_pre_header
      _
    $region3: #{tpu_custom_call.1} parent=1 // loop_header
      %s27 = sphi 0, %s31
      %p28 = scmp.ge.s32.totalorder %s27, 8
      %s34 = sphi 0, %s46
      %s35 = sphi 0, %s42
      %s36 = sphi 0, %s34
      %s37 = sphi 0, %s35
      %s38 = sphi 0, %s36
      %s39 = sphi 0, %s37
      %s53 = sphi 0, %s55
      %s56 = sphi 0, %s53
      %s57 = sphi 0, %s56
      %s73 = sphi 0, %s57
      %s83 = sphi 0, %s85
      %s86 = sphi 0, %s83
      %s87 = sphi 0, %s86
      %s103 = sphi 0, %s87
      %s111 = sphi 0, %s113
      %s114 = sphi 0, %s111
      %s115 = sphi 0, %s114
      %s131 = sphi 0, %s115
      %s139 = sphi 0, %s141
      %s142 = sphi 0, %s139
      %s143 = sphi 0, %s142
      %s159 = sphi 0, %s143
      %s167 = sphi 0, %s169
      %s170 = sphi 0, %s167
      %s171 = sphi 0, %s170
      %s187 = sphi 0, %s171
      %s195 = sphi 0, %s197
      %s198 = sphi 0, %s195
      %s199 = sphi 0, %s198
      %s215 = sphi 0, %s199
    $region4: #{tpu_custom_call.1} parent=1 // loop_header_branch
      %30 = sbr.rel (%p28) target = $region8
    $region5: #{tpu_custom_call.1} parent=1 // loop_body
      %s32 = ssub.s32 %s27, 1
      %s33 = ssub.s32 %s27, 2
      %s40 = sadd.s32 1, %s35
      %p41 = scmp.ge.s32.totalorder %s40, 3
      %s42 = scalar_select %p41, 0, %s40
      %s43 = sadd.s32 1, %s34
      %s44 = scalar_select %p41, %s43, %s34
      %p45 = scmp.ge.s32.totalorder %s44, 2
      %s46 = scalar_select %p45, 0, %s44
      %s47 = sadd.s32 %s35, 1
      %s48 = sadd.s32 %s42, 1
      %s49 = ssub.s32 %s34, %s46
      %s50 = ssub.s32 %s47, %s48
      %s51 = sor.u32 %s49, %s50
      %p52 = scmp.eq.s32.totalorder %s51, 0
      %s54 = sadd.s32 %s53, 1
      %s55 = scalar_select %p52, %s53, %s54
      %p58 = pneg %p52
      %p59 = scmp.eq.s32.totalorder %s27, 5
      %p60 = por %p58, %p59
      %p61 = scmp.ne.s32.totalorder %s53, %s56
      %p62 = scmp.eq.s32.totalorder %s27, 0
      %p63 = por %p61, %p62
      %p64 = scmp.ne.s32.totalorder %s53, %s56
      %p65 = scmp.eq.s32.totalorder %s32, 5
      %p66 = por %p64, %p65
      %p67 = scmp.ne.s32.totalorder %s56, %s57
      %p68 = scmp.eq.s32.totalorder %s32, 0
      %p69 = por %p67, %p68
      %p70 = scmp.ne.s32.totalorder %s56, %s57
      %p71 = scmp.eq.s32.totalorder %s33, 5
      %p72 = por %p70, %p71
      %p74 = scmp.ne.s32.totalorder %s57, %s73
      %p75 = scmp.eq.s32.totalorder %s33, 0
      %p76 = por %p74, %p75
      %s77 = sadd.s32 %s35, 1
      %s78 = sadd.s32 %s42, 1
      %s79 = ssub.s32 %s34, %s46
      %s80 = ssub.s32 %s77, %s78
      %s81 = sor.u32 %s79, %s80
      %p82 = scmp.eq.s32.totalorder %s81, 0
      %s84 = sadd.s32 %s83, 1
      %s85 = scalar_select %p82, %s83, %s84
      %p88 = pneg %p82
      %p89 = scmp.eq.s32.totalorder %s27, 5
      %p90 = por %p88, %p89
      %p91 = scmp.ne.s32.totalorder %s83, %s86
      %p92 = scmp.eq.s32.totalorder %s27, 0
      %p93 = por %p91, %p92
      %p94 = scmp.ne.s32.totalorder %s83, %s86
      %p95 = scmp.eq.s32.totalorder %s32, 5
      %p96 = por %p94, %p95
      %p97 = scmp.ne.s32.totalorder %s86, %s87
      %p98 = scmp.eq.s32.totalorder %s32, 0
      %p99 = por %p97, %p98
      %p100 = scmp.ne.s32.totalorder %s86, %s87
      %p101 = scmp.eq.s32.totalorder %s33, 5
      %p102 = por %p100, %p101
      %p104 = scmp.ne.s32.totalorder %s87, %s103
      %p105 = scmp.eq.s32.totalorder %s33, 0
      %p106 = por %p104, %p105
      %s107 = ssub.s32 %s34, %s46
      %s108 = ssub.s32 %s35, %s42
      %s109 = sor.u32 %s107, %s108
      %p110 = scmp.eq.s32.totalorder %s109, 0
      %s112 = sadd.s32 %s111, 1
      %s113 = scalar_select %p110, %s111, %s112
      %p116 = pneg %p110
      %p117 = scmp.eq.s32.totalorder %s27, 5
      %p118 = por %p116, %p117
      %p119 = scmp.ne.s32.totalorder %s111, %s114
      %p120 = scmp.eq.s32.totalorder %s27, 0
      %p121 = por %p119, %p120
      %p122 = scmp.ne.s32.totalorder %s111, %s114
      %p123 = scmp.eq.s32.totalorder %s32, 5
      %p124 = por %p122, %p123
      %p125 = scmp.ne.s32.totalorder %s114, %s115
      %p126 = scmp.eq.s32.totalorder %s32, 0
      %p127 = por %p125, %p126
      %p128 = scmp.ne.s32.totalorder %s114, %s115
      %p129 = scmp.eq.s32.totalorder %s33, 5
      %p130 = por %p128, %p129
      %p132 = scmp.ne.s32.totalorder %s115, %s131
      %p133 = scmp.eq.s32.totalorder %s33, 0
      %p134 = por %p132, %p133
      %s135 = ssub.s32 %s34, %s46
      %s136 = ssub.s32 %s35, %s42
      %s137 = sor.u32 %s135, %s136
      %p138 = scmp.eq.s32.totalorder %s137, 0
      %s140 = sadd.s32 %s139, 1
      %s141 = scalar_select %p138, %s139, %s140
      %p144 = pneg %p138
      %p145 = scmp.eq.s32.totalorder %s27, 5
      %p146 = por %p144, %p145
      %p147 = scmp.ne.s32.totalorder %s139, %s142
      %p148 = scmp.eq.s32.totalorder %s27, 0
      %p149 = por %p147, %p148
      %p150 = scmp.ne.s32.totalorder %s139, %s142
      %p151 = scmp.eq.s32.totalorder %s32, 5
      %p152 = por %p150, %p151
      %p153 = scmp.ne.s32.totalorder %s142, %s143
      %p154 = scmp.eq.s32.totalorder %s32, 0
      %p155 = por %p153, %p154
      %p156 = scmp.ne.s32.totalorder %s142, %s143
      %p157 = scmp.eq.s32.totalorder %s33, 5
      %p158 = por %p156, %p157
      %p160 = scmp.ne.s32.totalorder %s143, %s159
      %p161 = scmp.eq.s32.totalorder %s33, 0
      %p162 = por %p160, %p161
      %s163 = ssub.s32 %s34, %s46
      %s164 = ssub.s32 %s35, %s42
      %s165 = sor.u32 %s163, %s164
      %p166 = scmp.eq.s32.totalorder %s165, 0
      %s168 = sadd.s32 %s167, 1
      %s169 = scalar_select %p166, %s167, %s168
      %p172 = pneg %p166
      %p173 = scmp.eq.s32.totalorder %s27, 5
      %p174 = por %p172, %p173
      %p175 = scmp.ne.s32.totalorder %s167, %s170
      %p176 = scmp.eq.s32.totalorder %s27, 0
      %p177 = por %p175, %p176
      %p178 = scmp.ne.s32.totalorder %s167, %s170
      %p179 = scmp.eq.s32.totalorder %s32, 5
      %p180 = por %p178, %p179
      %p181 = scmp.ne.s32.totalorder %s170, %s171
      %p182 = scmp.eq.s32.totalorder %s32, 0
      %p183 = por %p181, %p182
      %p184 = scmp.ne.s32.totalorder %s170, %s171
      %p185 = scmp.eq.s32.totalorder %s33, 5
      %p186 = por %p184, %p185
      %p188 = scmp.ne.s32.totalorder %s171, %s187
      %p189 = scmp.eq.s32.totalorder %s33, 0
      %p190 = por %p188, %p189
      %s191 = ssub.s32 %s34, %s46
      %s192 = ssub.s32 %s35, %s42
      %s193 = sor.u32 %s191, %s192
      %p194 = scmp.eq.s32.totalorder %s193, 0
      %s196 = sadd.s32 %s195, 1
      %s197 = scalar_select %p194, %s195, %s196
      %p200 = pneg %p194
      %p201 = scmp.eq.s32.totalorder %s27, 5
      %p202 = por %p200, %p201
      %p203 = scmp.ne.s32.totalorder %s195, %s198
      %p204 = scmp.eq.s32.totalorder %s27, 0
      %p205 = por %p203, %p204
      %p206 = scmp.ne.s32.totalorder %s195, %s198
      %p207 = scmp.eq.s32.totalorder %s32, 5
      %p208 = por %p206, %p207
      %p209 = scmp.ne.s32.totalorder %s198, %s199
      %p210 = scmp.eq.s32.totalorder %s32, 0
      %p211 = por %p209, %p210
      %p212 = scmp.ne.s32.totalorder %s198, %s199
      %p213 = scmp.eq.s32.totalorder %s33, 5
      %p214 = por %p212, %p213
      %p216 = scmp.ne.s32.totalorder %s199, %s215
      %p217 = scmp.eq.s32.totalorder %s33, 0
      %p218 = por %p216, %p217
      %p219 = scmp.le.s32.totalorder 1, %s27
      %p220 = scmp.lt.s32.totalorder %s27, 7
      %p221 = pnand %p219, %p220
      %p222 = pneg %p221
      // Predicated region
      $region9: #{tpu_custom_call.1} parent=5 // pred_check
        _
      $region10: #{tpu_custom_call.1} parent=5 // pred_check_branch
        %224 = sbr.rel (%p221) target = $region12
      $region11: #{tpu_custom_call.1} parent=5 // pred_region
        %s225 = ssub.s32 %s27, 1
      $region12: #{tpu_custom_call.1} parent=5 // pred_fallthru
        _
      %p226 = scmp.lt.s32.totalorder %s27, 6
      // Predicated region
      $region13: #{tpu_custom_call.1} parent=5 // pred_check
        %p227 = pneg %p226
      $region14: #{tpu_custom_call.1} parent=5 // pred_check_branch
        %229 = sbr.rel (%p227) target = $region16
      $region15: #{tpu_custom_call.1} parent=5 // pred_region
        // Predicated region
        $region17: #{tpu_custom_call.1} parent=15 // pred_check
          %p230 = pneg %p63
        $region18: #{tpu_custom_call.1} parent=15 // pred_check_branch
          %232 = sbr.rel (%p230) target = $region20
        $region19: #{tpu_custom_call.1} parent=15 // pred_region
          %s233 = sand.u32 %s53, 1
          %s234 = scalar_lea.sflag [#allocation3], %s233
          %s235 = sand.u32 %s53, 1
          %s236 = smul.addr %s235, 16
          %s237 = scalar_lea.vmem [#allocation2], %s236
          %s238 = sadd.s32 %s35, 1
          %s240 = ssub.s32 256, 256
          %241 = vsyncadd %s234, %s240
          %s242 = smul.addr %s238, 2
          %s243 = smul.addr %s34, 8
          %s244 = sadd.s32 %s242, %s243
          %s245 = smul.addr %s244, 128
          %s246 = scalar_lea.hbm %s0, %s245
          %s247 = sshll.u32 %s237, 4
          %s248 = int_to_ptr.vmem [resolvable:$true] %s247
          %253 = dma.hbm_to_vmem [thread:$0]  %s246, 256, %s248, %s234, 128, 128, 8
        $region20: #{tpu_custom_call.1} parent=15 // pred_fallthru
          _
        // Predicated region
        $region21: #{tpu_custom_call.1} parent=15 // pred_check
          %p254 = pneg %p93
        $region22: #{tpu_custom_call.1} parent=15 // pred_check_branch
          %256 = sbr.rel (%p254) target = $region24
        $region23: #{tpu_custom_call.1} parent=15 // pred_region
          %s257 = sand.u32 %s83, 1
          %s258 = scalar_lea.sflag [#allocation6], %s257
          %s259 = sand.u32 %s83, 1
          %s260 = smul.addr %s259, 16
          %s261 = scalar_lea.vmem [#allocation5], %s260
          %s262 = sadd.s32 %s35, 1
          %s264 = ssub.s32 256, 256
          %265 = vsyncadd %s258, %s264
          %s266 = smul.addr %s262, 2
          %s267 = smul.addr %s34, 8
          %s268 = sadd.s32 %s266, %s267
          %s269 = smul.addr %s268, 128
          %s270 = scalar_lea.hbm %s1, %s269
          %s271 = sshll.u32 %s261, 4
          %s272 = int_to_ptr.vmem [resolvable:$true] %s271
          %277 = dma.hbm_to_vmem [thread:$0]  %s270, 256, %s272, %s258, 128, 128, 8
        $region24: #{tpu_custom_call.1} parent=15 // pred_fallthru
          _
      $region16: #{tpu_custom_call.1} parent=5 // pred_fallthru
        _
      %p278 = scmp.le.s32.totalorder 1, %s27
      %p279 = scmp.lt.s32.totalorder %s27, 7
      %p280 = pnand %p278, %p279
      %p281 = pneg %p280
      // Predicated region
      $region25: #{tpu_custom_call.1} parent=5 // pred_check
        _
      $region26: #{tpu_custom_call.1} parent=5 // pred_check_branch
        %283 = sbr.rel (%p280) target = $region28
      $region27: #{tpu_custom_call.1} parent=5 // pred_region
        %s284 = ssub.s32 %s27, 1
        %s285 = sand.u32 %s56, 1
        %s286 = scalar_lea.sflag [#allocation3], %s285
        %s287 = sand.u32 %s56, 1
        %s288 = smul.addr %s287, 16
        %s289 = scalar_lea.vmem [#allocation2], %s288
        // Predicated region
        $region29: #{tpu_custom_call.1} parent=27 // pred_check
          %p290 = pneg %p69
        $region30: #{tpu_custom_call.1} parent=27 // pred_check_branch
          %292 = sbr.rel (%p290) target = $region32
        $region31: #{tpu_custom_call.1} parent=27 // pred_region
          %293 = dma.done %s286, 256
        $region32: #{tpu_custom_call.1} parent=27 // pred_fallthru
          _
        %s294 = sand.u32 %s86, 1
        %s295 = scalar_lea.sflag [#allocation6], %s294
        %s296 = sand.u32 %s86, 1
        %s297 = smul.addr %s296, 16
        %s298 = scalar_lea.vmem [#allocation5], %s297
        // Predicated region
        $region33: #{tpu_custom_call.1} parent=27 // pred_check
          %p299 = pneg %p99
        $region34: #{tpu_custom_call.1} parent=27 // pred_check_branch
          %301 = sbr.rel (%p299) target = $region36
        $region35: #{tpu_custom_call.1} parent=27 // pred_region
          %302 = dma.done %s295, 256
        $region36: #{tpu_custom_call.1} parent=27 // pred_fallthru
          _
        %s303 = sand.u32 %s56, 1
        %s304 = scalar_lea.sflag [#allocation3], %s303
        %s305 = sand.u32 %s56, 1
        %s306 = smul.addr %s305, 16
        %s307 = scalar_lea.vmem [#allocation2], %s306
        %p308 = pneg %p69
        %p309 = pneg %p66
        %s310 = sand.u32 %s86, 1
        %s311 = scalar_lea.sflag [#allocation6], %s310
        %s312 = sand.u32 %s86, 1
        %s313 = smul.addr %s312, 16
        %s314 = scalar_lea.vmem [#allocation5], %s313
        %p315 = pneg %p99
        %p316 = pneg %p96
        %p317 = pneg %p127
        %p318 = pneg %p124
        %s319 = sand.u32 %s114, 1
        %s320 = scalar_lea.sflag [#allocation4], %s319
        %s321 = sand.u32 %s114, 1
        %s322 = smul.addr %s321, 8
        %s323 = scalar_lea.vmem [#allocation7], %s322
        %p324 = pneg %p155
        %p325 = pneg %p152
        %s326 = sand.u32 %s32, 1
        %s327 = scalar_lea.sflag [#allocation9], %s326
        %s328 = sand.u32 %s142, 1
        %s329 = smul.addr %s328, 8
        %s330 = scalar_lea.vmem [#allocation8], %s329
        %p331 = pneg %p183
        %p332 = pneg %p180
        %s333 = sand.u32 %s32, 1
        %s334 = scalar_lea.sflag [#allocation9], %s333
        %s335 = sand.u32 %s170, 1
        %s336 = smul.addr %s335, 8
        %s337 = scalar_lea.vmem [#allocation10], %s336
        %p338 = pneg %p211
        %p339 = pneg %p208
        %s340 = sand.u32 %s198, 1
        %s341 = scalar_lea.sflag [#allocation12], %s340
        %s342 = sand.u32 %s198, 1
        %s343 = smul.addr %s342, 8
        %s344 = scalar_lea.vmem [#allocation11], %s343
        %s345 = sadd.s32 %s37, 1
        %s346 = sadd.s32 %s37, 1
        %v347 = vld [vmem:[%s289] sm:$0xff]
        %v348 = vld [vmem:[%s289 + $0x8] sm:$0xff]
        %v349 = vld [vmem:[%s298] sm:$0xff]
        %v350 = vld [vmem:[%s298 + $0x8] sm:$0xff]
        %vm353 = vcmask 1040384
        %v354 = vrot.slane %v349, 7
        %v355 = vrot.slane %v350, 7
        %v356 = vsel %vm353, %v354, %v355
        %v359 = vsel %vm353, %v349, %v354
        %v360 = vmin.f32 %v349, %v359
        %v361 = vmin.f32 %v350, %v356
        %vm362 = vcmask 1046528
        %v363 = vrot.slane %v349, 1
        %v364 = vrot.slane %v350, 1
        %v365 = vsel %vm362, %v363, %v364
        %v368 = vsel %vm362, %v364, %v350
        %v369 = vmin.f32 %v360, %v365
        %v370 = vmin.f32 %v361, %v368
        %371 = vrot.lane.b32.xlu0 %v349, 1
        %v372 = vpop.permute.xlu0 %371
        %373 = vrot.lane.b32.xlu0 %v350, 1
        %v374 = vpop.permute.xlu0 %373
        %vm377 = vcmask 7168
        %v378 = vsel %vm377, %v349, %v372
        %v379 = vsel %vm377, %v350, %v374
        %v380 = vmin.f32 %v349, %v378
        %v381 = vmin.f32 %v350, %v379
        %382 = vrot.lane.b32.xlu0 %v349, 127
        %v383 = vpop.permute.xlu0 %382
        %384 = vrot.lane.b32.xlu0 %v350, 127
        %v385 = vpop.permute.xlu0 %384
        %vm388 = vcmask 121856
        %v389 = vsel %vm388, %v383, %v349
        %v390 = vsel %vm388, %v385, %v350
        %v391 = vmin.f32 %v380, %v389
        %v392 = vmin.f32 %v381, %v390
        %v393 = vmin.f32 %v369, %v391
        %v394 = vmin.f32 %v370, %v392
        %v397 = vrot.slane %v393, 7
        %v398 = vrot.slane %v394, 7
        %v399 = vsel %vm353, %v397, %v398
        %v402 = vsel %vm353, %v393, %v397
        %v403 = vmax.f32 %v393, %v402
        %v404 = vmax.f32 %v394, %v399
        %v405 = vrot.slane %v393, 1
        %v406 = vrot.slane %v394, 1
        %v407 = vsel %vm362, %v405, %v406
        %v410 = vsel %vm362, %v406, %v394
        %v411 = vmax.f32 %v403, %v407
        %v412 = vmax.f32 %v404, %v410
        %415 = vrot.lane.b32.xlu0 %v411, 1
        %v416 = vpop.permute.xlu0 %415
        %417 = vrot.lane.b32.xlu0 %v412, 1
        %v418 = vpop.permute.xlu0 %417
        %v421 = vsel %vm377, %v411, %v416
        %v422 = vsel %vm377, %v412, %v418
        %v423 = vmax.f32 %v411, %v421
        %v424 = vmax.f32 %v412, %v422
        %425 = vrot.lane.b32.xlu0 %v411, 127
        %v426 = vpop.permute.xlu0 %425
        %427 = vrot.lane.b32.xlu0 %v412, 127
        %v428 = vpop.permute.xlu0 %427
        %v431 = vsel %vm388, %v426, %v411
        %v432 = vsel %vm388, %v428, %v412
        %v433 = vmax.f32 %v423, %v431
        %v434 = vmax.f32 %v424, %v432
        %v435 = vsub.f32 %v349, %v433
        %v436 = vsub.f32 %v350, %v434
        %v437 = vmax.f32 %v435, 0.0
        %v438 = vmax.f32 %v436, 0.0
        %v439 = vmin.f32 %v393, %v402
        %v440 = vmin.f32 %v394, %v399
        %v441 = vmin.f32 %v439, %v407
        %v442 = vmin.f32 %v440, %v410
        %443 = vrot.lane.b32.xlu0 %v393, 1
        %v444 = vpop.permute.xlu0 %443
        %445 = vrot.lane.b32.xlu0 %v394, 1
        %v446 = vpop.permute.xlu0 %445
        %v449 = vsel %vm377, %v393, %v444
        %v450 = vsel %vm377, %v394, %v446
        %v451 = vmin.f32 %v393, %v449
        %v452 = vmin.f32 %v394, %v450
        %453 = vrot.lane.b32.xlu0 %v393, 127
        %v454 = vpop.permute.xlu0 %453
        %455 = vrot.lane.b32.xlu0 %v394, 127
        %v456 = vpop.permute.xlu0 %455
        %v459 = vsel %vm388, %v454, %v393
        %v460 = vsel %vm388, %v456, %v394
        %v461 = vmin.f32 %v451, %v459
        %v462 = vmin.f32 %v452, %v460
        %v463 = vmin.f32 %v441, %v461
        %v464 = vmin.f32 %v442, %v462
        %v467 = vrot.slane %v463, 7
        %v468 = vrot.slane %v464, 7
        %v469 = vsel %vm353, %v467, %v468
        %v472 = vsel %vm353, %v463, %v467
        %v473 = vmax.f32 %v463, %v472
        %v474 = vmax.f32 %v464, %v469
        %v475 = vrot.slane %v463, 1
        %v476 = vrot.slane %v464, 1
        %v477 = vsel %vm362, %v475, %v476
        %v480 = vsel %vm362, %v476, %v464
        %v481 = vmax.f32 %v473, %v477
        %v482 = vmax.f32 %v474, %v480
        %485 = vrot.lane.b32.xlu0 %v481, 1
        %v486 = vpop.permute.xlu0 %485
        %487 = vrot.lane.b32.xlu0 %v482, 1
        %v488 = vpop.permute.xlu0 %487
        %v491 = vsel %vm377, %v481, %v486
        %v492 = vsel %vm377, %v482, %v488
        %v493 = vmax.f32 %v481, %v491
        %v494 = vmax.f32 %v482, %v492
        %495 = vrot.lane.b32.xlu0 %v481, 127
        %v496 = vpop.permute.xlu0 %495
        %497 = vrot.lane.b32.xlu0 %v482, 127
        %v498 = vpop.permute.xlu0 %497
        %v501 = vsel %vm388, %v496, %v481
        %v502 = vsel %vm388, %v498, %v482
        %v503 = vmax.f32 %v493, %v501
        %v504 = vmax.f32 %v494, %v502
        %v505 = vsub.f32 %v393, %v503
        %v506 = vsub.f32 %v394, %v504
        %v507 = vmax.f32 %v505, 0.0
        %v508 = vmax.f32 %v506, 0.0
        %v509 = vmul.f32 %v437, %v507
        %v510 = vmul.f32 %v438, %v508
        %v511 = vsub.f32 %v507, %v509
        %v512 = vsub.f32 %v508, %v510
        %v513 = vmax.f32 %v511, 0.0
        %v514 = vmax.f32 %v512, 0.0
        %v515 = vadd.f32 %v437, %v513
        %v516 = vadd.f32 %v438, %v514
        %v517 = vmin.f32 %v463, %v472
        %v518 = vmin.f32 %v464, %v469
        %v519 = vmin.f32 %v517, %v477
        %v520 = vmin.f32 %v518, %v480
        %521 = vrot.lane.b32.xlu0 %v463, 1
        %v522 = vpop.permute.xlu0 %521
        %523 = vrot.lane.b32.xlu0 %v464, 1
        %v524 = vpop.permute.xlu0 %523
        %v527 = vsel %vm377, %v463, %v522
        %v528 = vsel %vm377, %v464, %v524
        %v529 = vmin.f32 %v463, %v527
        %v530 = vmin.f32 %v464, %v528
        %531 = vrot.lane.b32.xlu0 %v463, 127
        %v532 = vpop.permute.xlu0 %531
        %533 = vrot.lane.b32.xlu0 %v464, 127
        %v534 = vpop.permute.xlu0 %533
        %v537 = vsel %vm388, %v532, %v463
        %v538 = vsel %vm388, %v534, %v464
        %v539 = vmin.f32 %v529, %v537
        %v540 = vmin.f32 %v530, %v538
        %v541 = vmin.f32 %v519, %v539
        %v542 = vmin.f32 %v520, %v540
        %v545 = vrot.slane %v541, 7
        %v546 = vrot.slane %v542, 7
        %v547 = vsel %vm353, %v545, %v546
        %v550 = vsel %vm353, %v541, %v545
        %v551 = vmax.f32 %v541, %v550
        %v552 = vmax.f32 %v542, %v547
        %v553 = vrot.slane %v541, 1
        %v554 = vrot.slane %v542, 1
        %v555 = vsel %vm362, %v553, %v554
        %v558 = vsel %vm362, %v554, %v542
        %v559 = vmax.f32 %v551, %v555
        %v560 = vmax.f32 %v552, %v558
        %563 = vrot.lane.b32.xlu0 %v559, 1
        %v564 = vpop.permute.xlu0 %563
        %565 = vrot.lane.b32.xlu0 %v560, 1
        %v566 = vpop.permute.xlu0 %565
        %v569 = vsel %vm377, %v559, %v564
        %v570 = vsel %vm377, %v560, %v566
        %v571 = vmax.f32 %v559, %v569
        %v572 = vmax.f32 %v560, %v570
        %573 = vrot.lane.b32.xlu0 %v559, 127
        %v574 = vpop.permute.xlu0 %573
        %575 = vrot.lane.b32.xlu0 %v560, 127
        %v576 = vpop.permute.xlu0 %575
        %v579 = vsel %vm388, %v574, %v559
        %v580 = vsel %vm388, %v576, %v560
        %v581 = vmax.f32 %v571, %v579
        %v582 = vmax.f32 %v572, %v580
        %v583 = vsub.f32 %v463, %v581
        %v584 = vsub.f32 %v464, %v582
        %v585 = vmax.f32 %v583, 0.0
        %v586 = vmax.f32 %v584, 0.0
        %v587 = vmul.f32 %v515, %v585
        %v588 = vmul.f32 %v516, %v586
        %v589 = vsub.f32 %v585, %v587
        %v590 = vsub.f32 %v586, %v588
        %v591 = vmax.f32 %v589, 0.0
        %v592 = vmax.f32 %v590, 0.0
        %v593 = vadd.f32 %v515, %v591
        %v594 = vadd.f32 %v516, %v592
        %v595 = vmin.f32 %v541, %v550
        %v596 = vmin.f32 %v542, %v547
        %v597 = vmin.f32 %v595, %v555
        %v598 = vmin.f32 %v596, %v558
        %599 = vrot.lane.b32.xlu0 %v541, 1
        %v600 = vpop.permute.xlu0 %599
        %601 = vrot.lane.b32.xlu0 %v542, 1
        %v602 = vpop.permute.xlu0 %601
        %v605 = vsel %vm377, %v541, %v600
        %v606 = vsel %vm377, %v542, %v602
        %v607 = vmin.f32 %v541, %v605
        %v608 = vmin.f32 %v542, %v606
        %609 = vrot.lane.b32.xlu0 %v541, 127
        %v610 = vpop.permute.xlu0 %609
        %611 = vrot.lane.b32.xlu0 %v542, 127
        %v612 = vpop.permute.xlu0 %611
        %v615 = vsel %vm388, %v610, %v541
        %v616 = vsel %vm388, %v612, %v542
        %v617 = vmin.f32 %v607, %v615
        %v618 = vmin.f32 %v608, %v616
        %v619 = vmin.f32 %v597, %v617
        %v620 = vmin.f32 %v598, %v618
        %v623 = vrot.slane %v619, 7
        %v624 = vrot.slane %v620, 7
        %v625 = vsel %vm353, %v623, %v624
        %v628 = vsel %vm353, %v619, %v623
        %v629 = vmax.f32 %v619, %v628
        %v630 = vmax.f32 %v620, %v625
        %v631 = vrot.slane %v619, 1
        %v632 = vrot.slane %v620, 1
        %v633 = vsel %vm362, %v631, %v632
        %v636 = vsel %vm362, %v632, %v620
        %v637 = vmax.f32 %v629, %v633
        %v638 = vmax.f32 %v630, %v636
        %641 = vrot.lane.b32.xlu0 %v637, 1
        %v642 = vpop.permute.xlu0 %641
        %643 = vrot.lane.b32.xlu0 %v638, 1
        %v644 = vpop.permute.xlu0 %643
        %v647 = vsel %vm377, %v637, %v642
        %v648 = vsel %vm377, %v638, %v644
        %v649 = vmax.f32 %v637, %v647
        %v650 = vmax.f32 %v638, %v648
        %651 = vrot.lane.b32.xlu0 %v637, 127
        %v652 = vpop.permute.xlu0 %651
        %653 = vrot.lane.b32.xlu0 %v638, 127
        %v654 = vpop.permute.xlu0 %653
        %v657 = vsel %vm388, %v652, %v637
        %v658 = vsel %vm388, %v654, %v638
        %v659 = vmax.f32 %v649, %v657
        %v660 = vmax.f32 %v650, %v658
        %v661 = vsub.f32 %v541, %v659
        %v662 = vsub.f32 %v542, %v660
        %v663 = vmax.f32 %v661, 0.0
        %v664 = vmax.f32 %v662, 0.0
        %v665 = vmul.f32 %v593, %v663
        %v666 = vmul.f32 %v594, %v664
        %v667 = vsub.f32 %v663, %v665
        %v668 = vsub.f32 %v664, %v666
        %v669 = vmax.f32 %v667, 0.0
        %v670 = vmax.f32 %v668, 0.0
        %v671 = vadd.f32 %v593, %v669
        %v672 = vadd.f32 %v594, %v670
        %v675 = vrot.slane %v347, 7
        %v676 = vrot.slane %v348, 7
        %v677 = vsel %vm353, %v675, %v676
        %v680 = vsel %vm353, %v347, %v675
        %v681 = vmin.f32 %v347, %v680
        %v682 = vmin.f32 %v348, %v677
        %v683 = vrot.slane %v347, 1
        %v684 = vrot.slane %v348, 1
        %v685 = vsel %vm362, %v683, %v684
        %v688 = vsel %vm362, %v684, %v348
        %v689 = vmin.f32 %v681, %v685
        %v690 = vmin.f32 %v682, %v688
        %691 = vrot.lane.b32.xlu0 %v347, 1
        %v692 = vpop.permute.xlu0 %691
        %693 = vrot.lane.b32.xlu0 %v348, 1
        %v694 = vpop.permute.xlu0 %693
        %v697 = vsel %vm377, %v347, %v692
        %v698 = vsel %vm377, %v348, %v694
        %v699 = vmin.f32 %v347, %v697
        %v700 = vmin.f32 %v348, %v698
        %701 = vrot.lane.b32.xlu0 %v347, 127
        %v702 = vpop.permute.xlu0 %701
        %703 = vrot.lane.b32.xlu0 %v348, 127
        %v704 = vpop.permute.xlu0 %703
        %v707 = vsel %vm388, %v702, %v347
        %v708 = vsel %vm388, %v704, %v348
        %v709 = vmin.f32 %v699, %v707
        %v710 = vmin.f32 %v700, %v708
        %v711 = vmin.f32 %v689, %v709
        %v712 = vmin.f32 %v690, %v710
        %v715 = vrot.slane %v711, 7
        %v716 = vrot.slane %v712, 7
        %v717 = vsel %vm353, %v715, %v716
        %v720 = vsel %vm353, %v711, %v715
        %v721 = vmax.f32 %v711, %v720
        %v722 = vmax.f32 %v712, %v717
        %v723 = vrot.slane %v711, 1
        %v724 = vrot.slane %v712, 1
        %v725 = vsel %vm362, %v723, %v724
        %v728 = vsel %vm362, %v724, %v712
        %v729 = vmax.f32 %v721, %v725
        %v730 = vmax.f32 %v722, %v728
        %733 = vrot.lane.b32.xlu0 %v729, 1
        %v734 = vpop.permute.xlu0 %733
        %735 = vrot.lane.b32.xlu0 %v730, 1
        %v736 = vpop.permute.xlu0 %735
        %v739 = vsel %vm377, %v729, %v734
        %v740 = vsel %vm377, %v730, %v736
        %v741 = vmax.f32 %v729, %v739
        %v742 = vmax.f32 %v730, %v740
        %743 = vrot.lane.b32.xlu0 %v729, 127
        %v744 = vpop.permute.xlu0 %743
        %745 = vrot.lane.b32.xlu0 %v730, 127
        %v746 = vpop.permute.xlu0 %745
        %v749 = vsel %vm388, %v744, %v729
        %v750 = vsel %vm388, %v746, %v730
        %v751 = vmax.f32 %v741, %v749
        %v752 = vmax.f32 %v742, %v750
        %v753 = vsub.f32 %v347, %v751
        %v754 = vsub.f32 %v348, %v752
        %v755 = vmax.f32 %v753, 0.0
        %v756 = vmax.f32 %v754, 0.0
        %v757 = vmin.f32 %v711, %v720
        %v758 = vmin.f32 %v712, %v717
        %v759 = vmin.f32 %v757, %v725
        %v760 = vmin.f32 %v758, %v728
        %761 = vrot.lane.b32.xlu0 %v711, 1
        %v762 = vpop.permute.xlu0 %761
        %763 = vrot.lane.b32.xlu0 %v712, 1
        %v764 = vpop.permute.xlu0 %763
        %v767 = vsel %vm377, %v711, %v762
        %v768 = vsel %vm377, %v712, %v764
        %v769 = vmin.f32 %v711, %v767
        %v770 = vmin.f32 %v712, %v768
        %771 = vrot.lane.b32.xlu0 %v711, 127
        %v772 = vpop.permute.xlu0 %771
        %773 = vrot.lane.b32.xlu0 %v712, 127
        %v774 = vpop.permute.xlu0 %773
        %v777 = vsel %vm388, %v772, %v711
        %v778 = vsel %vm388, %v774, %v712
        %v779 = vmin.f32 %v769, %v777
        %v780 = vmin.f32 %v770, %v778
        %v781 = vmin.f32 %v759, %v779
        %v782 = vmin.f32 %v760, %v780
        %v785 = vrot.slane %v781, 7
        %v786 = vrot.slane %v782, 7
        %v787 = vsel %vm353, %v785, %v786
        %v790 = vsel %vm353, %v781, %v785
        %v791 = vmax.f32 %v781, %v790
        %v792 = vmax.f32 %v782, %v787
        %v793 = vrot.slane %v781, 1
        %v794 = vrot.slane %v782, 1
        %v795 = vsel %vm362, %v793, %v794
        %v798 = vsel %vm362, %v794, %v782
        %v799 = vmax.f32 %v791, %v795
        %v800 = vmax.f32 %v792, %v798
        %803 = vrot.lane.b32.xlu0 %v799, 1
        %v804 = vpop.permute.xlu0 %803
        %805 = vrot.lane.b32.xlu0 %v800, 1
        %v806 = vpop.permute.xlu0 %805
        %v809 = vsel %vm377, %v799, %v804
        %v810 = vsel %vm377, %v800, %v806
        %v811 = vmax.f32 %v799, %v809
        %v812 = vmax.f32 %v800, %v810
        %813 = vrot.lane.b32.xlu0 %v799, 127
        %v814 = vpop.permute.xlu0 %813
        %815 = vrot.lane.b32.xlu0 %v800, 127
        %v816 = vpop.permute.xlu0 %815
        %v819 = vsel %vm388, %v814, %v799
        %v820 = vsel %vm388, %v816, %v800
        %v821 = vmax.f32 %v811, %v819
        %v822 = vmax.f32 %v812, %v820
        %v823 = vsub.f32 %v711, %v821
        %v824 = vsub.f32 %v712, %v822
        %v825 = vmax.f32 %v823, 0.0
        %v826 = vmax.f32 %v824, 0.0
        %v827 = vmul.f32 %v755, %v825
        %v828 = vmul.f32 %v756, %v826
        %v829 = vsub.f32 %v825, %v827
        %v830 = vsub.f32 %v826, %v828
        %v831 = vmax.f32 %v829, 0.0
        %v832 = vmax.f32 %v830, 0.0
        %v833 = vadd.f32 %v755, %v831
        %v834 = vadd.f32 %v756, %v832
        %v835 = vmin.f32 %v781, %v790
        %v836 = vmin.f32 %v782, %v787
        %v837 = vmin.f32 %v835, %v795
        %v838 = vmin.f32 %v836, %v798
        %839 = vrot.lane.b32.xlu0 %v781, 1
        %v840 = vpop.permute.xlu0 %839
        %841 = vrot.lane.b32.xlu0 %v782, 1
        %v842 = vpop.permute.xlu0 %841
        %v845 = vsel %vm377, %v781, %v840
        %v846 = vsel %vm377, %v782, %v842
        %v847 = vmin.f32 %v781, %v845
        %v848 = vmin.f32 %v782, %v846
        %849 = vrot.lane.b32.xlu0 %v781, 127
        %v850 = vpop.permute.xlu0 %849
        %851 = vrot.lane.b32.xlu0 %v782, 127
        %v852 = vpop.permute.xlu0 %851
        %v855 = vsel %vm388, %v850, %v781
        %v856 = vsel %vm388, %v852, %v782
        %v857 = vmin.f32 %v847, %v855
        %v858 = vmin.f32 %v848, %v856
        %v859 = vmin.f32 %v837, %v857
        %v860 = vmin.f32 %v838, %v858
        %v863 = vrot.slane %v859, 7
        %v864 = vrot.slane %v860, 7
        %v865 = vsel %vm353, %v863, %v864
        %v868 = vsel %vm353, %v859, %v863
        %v869 = vmax.f32 %v859, %v868
        %v870 = vmax.f32 %v860, %v865
        %v871 = vrot.slane %v859, 1
        %v872 = vrot.slane %v860, 1
        %v873 = vsel %vm362, %v871, %v872
        %v876 = vsel %vm362, %v872, %v860
        %v877 = vmax.f32 %v869, %v873
        %v878 = vmax.f32 %v870, %v876
        %881 = vrot.lane.b32.xlu0 %v877, 1
        %v882 = vpop.permute.xlu0 %881
        %883 = vrot.lane.b32.xlu0 %v878, 1
        %v884 = vpop.permute.xlu0 %883
        %v887 = vsel %vm377, %v877, %v882
        %v888 = vsel %vm377, %v878, %v884
        %v889 = vmax.f32 %v877, %v887
        %v890 = vmax.f32 %v878, %v888
        %891 = vrot.lane.b32.xlu0 %v877, 127
        %v892 = vpop.permute.xlu0 %891
        %893 = vrot.lane.b32.xlu0 %v878, 127
        %v894 = vpop.permute.xlu0 %893
        %v897 = vsel %vm388, %v892, %v877
        %v898 = vsel %vm388, %v894, %v878
        %v899 = vmax.f32 %v889, %v897
        %v900 = vmax.f32 %v890, %v898
        %v901 = vsub.f32 %v781, %v899
        %v902 = vsub.f32 %v782, %v900
        %v903 = vmax.f32 %v901, 0.0
        %v904 = vmax.f32 %v902, 0.0
        %v905 = vmul.f32 %v833, %v903
        %v906 = vmul.f32 %v834, %v904
        %v907 = vsub.f32 %v903, %v905
        %v908 = vsub.f32 %v904, %v906
        %v909 = vmax.f32 %v907, 0.0
        %v910 = vmax.f32 %v908, 0.0
        %v911 = vadd.f32 %v833, %v909
        %v912 = vadd.f32 %v834, %v910
        %v913 = vmin.f32 %v859, %v868
        %v914 = vmin.f32 %v860, %v865
        %v915 = vmin.f32 %v913, %v873
        %v916 = vmin.f32 %v914, %v876
        %917 = vrot.lane.b32.xlu0 %v859, 1
        %v918 = vpop.permute.xlu0 %917
        %919 = vrot.lane.b32.xlu0 %v860, 1
        %v920 = vpop.permute.xlu0 %919
        %v923 = vsel %vm377, %v859, %v918
        %v924 = vsel %vm377, %v860, %v920
        %v925 = vmin.f32 %v859, %v923
        %v926 = vmin.f32 %v860, %v924
        %927 = vrot.lane.b32.xlu0 %v859, 127
        %v928 = vpop.permute.xlu0 %927
        %929 = vrot.lane.b32.xlu0 %v860, 127
        %v930 = vpop.permute.xlu0 %929
        %v933 = vsel %vm388, %v928, %v859
        %v934 = vsel %vm388, %v930, %v860
        %v935 = vmin.f32 %v925, %v933
        %v936 = vmin.f32 %v926, %v934
        %v937 = vmin.f32 %v915, %v935
        %v938 = vmin.f32 %v916, %v936
        %v941 = vrot.slane %v937, 7
        %v942 = vrot.slane %v938, 7
        %v943 = vsel %vm353, %v941, %v942
        %v946 = vsel %vm353, %v937, %v941
        %v947 = vmax.f32 %v937, %v946
        %v948 = vmax.f32 %v938, %v943
        %v949 = vrot.slane %v937, 1
        %v950 = vrot.slane %v938, 1
        %v951 = vsel %vm362, %v949, %v950
        %v954 = vsel %vm362, %v950, %v938
        %v955 = vmax.f32 %v947, %v951
        %v956 = vmax.f32 %v948, %v954
        %959 = vrot.lane.b32.xlu0 %v955, 1
        %v960 = vpop.permute.xlu0 %959
        %961 = vrot.lane.b32.xlu0 %v956, 1
        %v962 = vpop.permute.xlu0 %961
        %v965 = vsel %vm377, %v955, %v960
        %v966 = vsel %vm377, %v956, %v962
        %v967 = vmax.f32 %v955, %v965
        %v968 = vmax.f32 %v956, %v966
        %969 = vrot.lane.b32.xlu0 %v955, 127
        %v970 = vpop.permute.xlu0 %969
        %971 = vrot.lane.b32.xlu0 %v956, 127
        %v972 = vpop.permute.xlu0 %971
        %v975 = vsel %vm388, %v970, %v955
        %v976 = vsel %vm388, %v972, %v956
        %v977 = vmax.f32 %v967, %v975
        %v978 = vmax.f32 %v968, %v976
        %v979 = vsub.f32 %v859, %v977
        %v980 = vsub.f32 %v860, %v978
        %v981 = vmax.f32 %v979, 0.0
        %v982 = vmax.f32 %v980, 0.0
        %v983 = vmul.f32 %v911, %v981
        %v984 = vmul.f32 %v912, %v982
        %v985 = vsub.f32 %v981, %v983
        %v986 = vsub.f32 %v982, %v984
        %v987 = vmax.f32 %v985, 0.0
        %v988 = vmax.f32 %v986, 0.0
        %v989 = vadd.f32 %v911, %v987
        %v990 = vadd.f32 %v912, %v988
        %v991 = vmul.f32 %v671, %v347
        %v992 = vmul.f32 %v672, %v348
        %vm993 = vcmask 130048
        %v995 = vsel %vm993, 1.0, 0
        %997 = vmatprep.subr.mxu0 0.0
        %998 = vmatpush1.msra.mxu0 %v991
        %999 = vmatprep.subr.mxu0 0.0
        %1000 = vmatpush1.msra.mxu0 %v992
        %1001 = vmatprep.subr.mxu0 0.0
        %1002 = vmatpush1.msra.mxu0 0.0
        %1003 = vmatprep.subr.mxu0 0.0
        %1004 = vmatpush1.msra.mxu0 0.0
        %1005 = vmatprep.subr.mxu0 0.0
        %1006 = vmatpush1.msra.mxu0 0.0
        %1007 = vmatprep.subr.mxu0 0.0
        %1008 = vmatpush1.msra.mxu0 0.0
        %1009 = vmatprep.subr.mxu0 0.0
        %1010 = vmatpush1.msra.mxu0 0.0
        %1011 = vmatprep.subr.mxu0 0.0
        %1012 = vmatpush1.msra.mxu0 0.0
        %1013 = vmatprep.subr.mxu0 0.0
        %1014 = vmatpush1.msra.mxu0 0.0
        %1015 = vmatprep.subr.mxu0 0.0
        %1016 = vmatpush1.msra.mxu0 0.0
        %1017 = vmatprep.subr.mxu0 0.0
        %1018 = vmatpush1.msra.mxu0 0.0
        %1019 = vmatprep.subr.mxu0 0.0
        %1020 = vmatpush1.msra.mxu0 0.0
        %1021 = vmatprep.subr.mxu0 0.0
        %1022 = vmatpush1.msra.mxu0 0.0
        %1023 = vmatprep.subr.mxu0 0.0
        %1024 = vmatpush1.msra.mxu0 0.0
        %1025 = vmatprep.subr.mxu0 0.0
        %1026 = vmatpush1.msra.mxu0 0.0
        %1027 = vmatprep.subr.mxu0 0.0
        %1028 = vmatpush1.msra.mxu0 0.0
        %1029 = vmatprep.subr.mxu0 0.0
        %1030 = vmatpush1.msra.mxu0 0.0
        %1031 = vmatprep.subr.mxu0 0.0
        %1032 = vmatpush1.msra.mxu0 0.0
        %1033 = vmatprep.subr.mxu0 0.0
        %1034 = vmatpush1.msra.mxu0 0.0
        %1035 = vmatprep.subr.mxu0 0.0
        %1036 = vmatpush1.msra.mxu0 0.0
        %1037 = vmatprep.subr.mxu0 0.0
        %1038 = vmatpush1.msra.mxu0 0.0
        %1039 = vmatprep.subr.mxu0 0.0
        %1040 = vmatpush1.msra.mxu0 0.0
        %1041 = vmatprep.subr.mxu0 0.0
        %1042 = vmatpush1.msra.mxu0 0.0
        %1043 = vmatprep.subr.mxu0 0.0
        %1044 = vmatpush1.msra.mxu0 0.0
        %1045 = vmatprep.subr.mxu0 0.0
        %1046 = vmatpush1.msra.mxu0 0.0
        %1047 = vmatprep.subr.mxu0 0.0
        %1048 = vmatpush1.msra.mxu0 0.0
        %1049 = vmatprep.subr.mxu0 0.0
        %1050 = vmatpush1.msra.mxu0 0.0
        %1051 = vmatprep.subr.mxu0 0.0
        %1052 = vmatpush1.msra.mxu0 0.0
        %1053 = vmatprep.subr.mxu0 0.0
        %1054 = vmatpush1.msra.mxu0 0.0
        %1055 = vmatprep.subr.mxu0 0.0
        %1056 = vmatpush1.msra.mxu0 0.0
        %1057 = vmatprep.subr.mxu0 0.0
        %1058 = vmatpush1.msra.mxu0 0.0
        %1059 = vmatprep.subr.mxu0 0.0
        %1060 = vmatpush1.msra.mxu0 0.0
        %1061 = vmatprep.mubr.f32.mxu0 0.0
        %1062 = vmatmul.mubr.f32.gmra.mrb[0].mxu0 %v995
        %v1063 = vpop.f32.mrb[0].mxu0
        %v1064 = vadd.f32 0.0, %v1063
        %v1065 = vpop.f32.mrb[0].mxu0
        %1066 = vdwg.mxu0
        %vm1067 = vcmask 122880
        %v1068 = vsel %vm1067, %v1064, 0.0
        %1069 = vadd.xlane.f32.xlu0 %v1068
        %v1070 = vpop.xlane.xlu0 %1069
        %v1071 = vrot.slane %v1070, 4
        %v1072 = vadd.f32 %v1070, %v1071
        %v1073 = vrot.slane %v1072, 2
        %v1074 = vadd.f32 %v1072, %v1073
        %v1075 = vrot.slane %v1074, 1
        %v1076 = vadd.f32 %v1074, %v1075
        %s1077 = vtos %v1076
        %1078 = vmatprep.subr.mxu0 0.0
        %1079 = vmatpush1.msra.mxu0 %v671
        %1080 = vmatprep.subr.mxu0 0.0
        %1081 = vmatpush1.msra.mxu0 %v672
        %1082 = vmatprep.subr.mxu0 0.0
        %1083 = vmatpush1.msra.mxu0 0.0
        %1084 = vmatprep.subr.mxu0 0.0
        %1085 = vmatpush1.msra.mxu0 0.0
        %1086 = vmatprep.subr.mxu0 0.0
        %1087 = vmatpush1.msra.mxu0 0.0
        %1088 = vmatprep.subr.mxu0 0.0
        %1089 = vmatpush1.msra.mxu0 0.0
        %1090 = vmatprep.subr.mxu0 0.0
        %1091 = vmatpush1.msra.mxu0 0.0
        %1092 = vmatprep.subr.mxu0 0.0
        %1093 = vmatpush1.msra.mxu0 0.0
        %1094 = vmatprep.subr.mxu0 0.0
        %1095 = vmatpush1.msra.mxu0 0.0
        %1096 = vmatprep.subr.mxu0 0.0
        %1097 = vmatpush1.msra.mxu0 0.0
        %1098 = vmatprep.subr.mxu0 0.0
        %1099 = vmatpush1.msra.mxu0 0.0
        %1100 = vmatprep.subr.mxu0 0.0
        %1101 = vmatpush1.msra.mxu0 0.0
        %1102 = vmatprep.subr.mxu0 0.0
        %1103 = vmatpush1.msra.mxu0 0.0
        %1104 = vmatprep.subr.mxu0 0.0
        %1105 = vmatpush1.msra.mxu0 0.0
        %1106 = vmatprep.subr.mxu0 0.0
        %1107 = vmatpush1.msra.mxu0 0.0
        %1108 = vmatprep.subr.mxu0 0.0
        %1109 = vmatpush1.msra.mxu0 0.0
        %1110 = vmatprep.subr.mxu0 0.0
        %1111 = vmatpush1.msra.mxu0 0.0
        %1112 = vmatprep.subr.mxu0 0.0
        %1113 = vmatpush1.msra.mxu0 0.0
        %1114 = vmatprep.subr.mxu0 0.0
        %1115 = vmatpush1.msra.mxu0 0.0
        %1116 = vmatprep.subr.mxu0 0.0
        %1117 = vmatpush1.msra.mxu0 0.0
        %1118 = vmatprep.subr.mxu0 0.0
        %1119 = vmatpush1.msra.mxu0 0.0
        %1120 = vmatprep.subr.mxu0 0.0
        %1121 = vmatpush1.msra.mxu0 0.0
        %1122 = vmatprep.subr.mxu0 0.0
        %1123 = vmatpush1.msra.mxu0 0.0
        %1124 = vmatprep.subr.mxu0 0.0
        %1125 = vmatpush1.msra.mxu0 0.0
        %1126 = vmatprep.subr.mxu0 0.0
        %1127 = vmatpush1.msra.mxu0 0.0
        %1128 = vmatprep.subr.mxu0 0.0
        %1129 = vmatpush1.msra.mxu0 0.0
        %1130 = vmatprep.subr.mxu0 0.0
        %1131 = vmatpush1.msra.mxu0 0.0
        %1132 = vmatprep.subr.mxu0 0.0
        %1133 = vmatpush1.msra.mxu0 0.0
        %1134 = vmatprep.subr.mxu0 0.0
        %1135 = vmatpush1.msra.mxu0 0.0
        %1136 = vmatprep.subr.mxu0 0.0
        %1137 = vmatpush1.msra.mxu0 0.0
        %1138 = vmatprep.subr.mxu0 0.0
        %1139 = vmatpush1.msra.mxu0 0.0
        %1140 = vmatprep.subr.mxu0 0.0
        %1141 = vmatpush1.msra.mxu0 0.0
        %1142 = vmatprep.mubr.f32.mxu0 0.0
        %1143 = vmatmul.mubr.f32.gmra.mrb[0].mxu0 %v995
        %v1144 = vpop.f32.mrb[0].mxu0
        %v1145 = vadd.f32 0.0, %v1144
        %v1146 = vpop.f32.mrb[0].mxu0
        %1147 = vdwg.mxu0
        %v1148 = vsel %vm1067, %v1145, 0.0
        %1149 = vadd.xlane.f32.xlu0 %v1148
        %v1150 = vpop.xlane.xlu0 %1149
        %v1151 = vrot.slane %v1150, 4
        %v1152 = vadd.f32 %v1150, %v1151
        %v1153 = vrot.slane %v1152, 2
        %v1154 = vadd.f32 %v1152, %v1153
        %v1155 = vrot.slane %v1154, 1
        %v1156 = vadd.f32 %v1154, %v1155
        %s1157 = vtos %v1156
        %v1158 = vmul.f32 %v989, %v349
        %v1159 = vmul.f32 %v990, %v350
        %1160 = vmatprep.subr.mxu0 0.0
        %1161 = vmatpush1.msra.mxu0 %v1158
        %1162 = vmatprep.subr.mxu0 0.0
        %1163 = vmatpush1.msra.mxu0 %v1159
        %1164 = vmatprep.subr.mxu0 0.0
        %1165 = vmatpush1.msra.mxu0 0.0
        %1166 = vmatprep.subr.mxu0 0.0
        %1167 = vmatpush1.msra.mxu0 0.0
        %1168 = vmatprep.subr.mxu0 0.0
        %1169 = vmatpush1.msra.mxu0 0.0
        %1170 = vmatprep.subr.mxu0 0.0
        %1171 = vmatpush1.msra.mxu0 0.0
        %1172 = vmatprep.subr.mxu0 0.0
        %1173 = vmatpush1.msra.mxu0 0.0
        %1174 = vmatprep.subr.mxu0 0.0
        %1175 = vmatpush1.msra.mxu0 0.0
        %1176 = vmatprep.subr.mxu0 0.0
        %1177 = vmatpush1.msra.mxu0 0.0
        %1178 = vmatprep.subr.mxu0 0.0
        %1179 = vmatpush1.msra.mxu0 0.0
        %1180 = vmatprep.subr.mxu0 0.0
        %1181 = vmatpush1.msra.mxu0 0.0
        %1182 = vmatprep.subr.mxu0 0.0
        %1183 = vmatpush1.msra.mxu0 0.0
        %1184 = vmatprep.subr.mxu0 0.0
        %1185 = vmatpush1.msra.mxu0 0.0
        %1186 = vmatprep.subr.mxu0 0.0
        %1187 = vmatpush1.msra.mxu0 0.0
        %1188 = vmatprep.subr.mxu0 0.0
        %1189 = vmatpush1.msra.mxu0 0.0
        %1190 = vmatprep.subr.mxu0 0.0
        %1191 = vmatpush1.msra.mxu0 0.0
        %1192 = vmatprep.subr.mxu0 0.0
        %1193 = vmatpush1.msra.mxu0 0.0
        %1194 = vmatprep.subr.mxu0 0.0
        %1195 = vmatpush1.msra.mxu0 0.0
        %1196 = vmatprep.subr.mxu0 0.0
        %1197 = vmatpush1.msra.mxu0 0.0
        %1198 = vmatprep.subr.mxu0 0.0
        %1199 = vmatpush1.msra.mxu0 0.0
        %1200 = vmatprep.subr.mxu0 0.0
        %1201 = vmatpush1.msra.mxu0 0.0
        %1202 = vmatprep.subr.mxu0 0.0
        %1203 = vmatpush1.msra.mxu0 0.0
        %1204 = vmatprep.subr.mxu0 0.0
        %1205 = vmatpush1.msra.mxu0 0.0
        %1206 = vmatprep.subr.mxu0 0.0
        %1207 = vmatpush1.msra.mxu0 0.0
        %1208 = vmatprep.subr.mxu0 0.0
        %1209 = vmatpush1.msra.mxu0 0.0
        %1210 = vmatprep.subr.mxu0 0.0
        %1211 = vmatpush1.msra.mxu0 0.0
        %1212 = vmatprep.subr.mxu0 0.0
        %1213 = vmatpush1.msra.mxu0 0.0
        %1214 = vmatprep.subr.mxu0 0.0
        %1215 = vmatpush1.msra.mxu0 0.0
        %1216 = vmatprep.subr.mxu0 0.0
        %1217 = vmatpush1.msra.mxu0 0.0
        %1218 = vmatprep.subr.mxu0 0.0
        %1219 = vmatpush1.msra.mxu0 0.0
        %1220 = vmatprep.subr.mxu0 0.0
        %1221 = vmatpush1.msra.mxu0 0.0
        %1222 = vmatprep.subr.mxu0 0.0
        %1223 = vmatpush1.msra.mxu0 0.0
        %1224 = vmatprep.mubr.f32.mxu0 0.0
        %1225 = vmatmul.mubr.f32.gmra.mrb[0].mxu0 %v995
        %v1226 = vpop.f32.mrb[0].mxu0
        %v1227 = vadd.f32 0.0, %v1226
        %v1228 = vpop.f32.mrb[0].mxu0
        %1229 = vdwg.mxu0
        %v1230 = vsel %vm1067, %v1227, 0.0
        %1231 = vadd.xlane.f32.xlu0 %v1230
        %v1232 = vpop.xlane.xlu0 %1231
        %v1233 = vrot.slane %v1232, 4
        %v1234 = vadd.f32 %v1232, %v1233
        %v1235 = vrot.slane %v1234, 2
        %v1236 = vadd.f32 %v1234, %v1235
        %v1237 = vrot.slane %v1236, 1
        %v1238 = vadd.f32 %v1236, %v1237
        %s1239 = vtos %v1238
        %1240 = vmatprep.subr.mxu0 0.0
        %1241 = vmatpush1.msra.mxu0 %v989
        %1242 = vmatprep.subr.mxu0 0.0
        %1243 = vmatpush1.msra.mxu0 %v990
        %1244 = vmatprep.subr.mxu0 0.0
        %1245 = vmatpush1.msra.mxu0 0.0
        %1246 = vmatprep.subr.mxu0 0.0
        %1247 = vmatpush1.msra.mxu0 0.0
        %1248 = vmatprep.subr.mxu0 0.0
        %1249 = vmatpush1.msra.mxu0 0.0
        %1250 = vmatprep.subr.mxu0 0.0
        %1251 = vmatpush1.msra.mxu0 0.0
        %1252 = vmatprep.subr.mxu0 0.0
        %1253 = vmatpush1.msra.mxu0 0.0
        %1254 = vmatprep.subr.mxu0 0.0
        %1255 = vmatpush1.msra.mxu0 0.0
        %1256 = vmatprep.subr.mxu0 0.0
        %1257 = vmatpush1.msra.mxu0 0.0
        %1258 = vmatprep.subr.mxu0 0.0
        %1259 = vmatpush1.msra.mxu0 0.0
        %1260 = vmatprep.subr.mxu0 0.0
        %1261 = vmatpush1.msra.mxu0 0.0
        %1262 = vmatprep.subr.mxu0 0.0
        %1263 = vmatpush1.msra.mxu0 0.0
        %1264 = vmatprep.subr.mxu0 0.0
        %1265 = vmatpush1.msra.mxu0 0.0
        %1266 = vmatprep.subr.mxu0 0.0
        %1267 = vmatpush1.msra.mxu0 0.0
        %1268 = vmatprep.subr.mxu0 0.0
        %1269 = vmatpush1.msra.mxu0 0.0
        %1270 = vmatprep.subr.mxu0 0.0
        %1271 = vmatpush1.msra.mxu0 0.0
        %1272 = vmatprep.subr.mxu0 0.0
        %1273 = vmatpush1.msra.mxu0 0.0
        %1274 = vmatprep.subr.mxu0 0.0
        %1275 = vmatpush1.msra.mxu0 0.0
        %1276 = vmatprep.subr.mxu0 0.0
        %1277 = vmatpush1.msra.mxu0 0.0
        %1278 = vmatprep.subr.mxu0 0.0
        %1279 = vmatpush1.msra.mxu0 0.0
        %1280 = vmatprep.subr.mxu0 0.0
        %1281 = vmatpush1.msra.mxu0 0.0
        %1282 = vmatprep.subr.mxu0 0.0
        %1283 = vmatpush1.msra.mxu0 0.0
        %1284 = vmatprep.subr.mxu0 0.0
        %1285 = vmatpush1.msra.mxu0 0.0
        %1286 = vmatprep.subr.mxu0 0.0
        %1287 = vmatpush1.msra.mxu0 0.0
        %1288 = vmatprep.subr.mxu0 0.0
        %1289 = vmatpush1.msra.mxu0 0.0
        %1290 = vmatprep.subr.mxu0 0.0
        %1291 = vmatpush1.msra.mxu0 0.0
        %1292 = vmatprep.subr.mxu0 0.0
        %1293 = vmatpush1.msra.mxu0 0.0
        %1294 = vmatprep.subr.mxu0 0.0
        %1295 = vmatpush1.msra.mxu0 0.0
        %1296 = vmatprep.subr.mxu0 0.0
        %1297 = vmatpush1.msra.mxu0 0.0
        %1298 = vmatprep.subr.mxu0 0.0
        %1299 = vmatpush1.msra.mxu0 0.0
        %1300 = vmatprep.subr.mxu0 0.0
        %1301 = vmatpush1.msra.mxu0 0.0
        %1302 = vmatprep.subr.mxu0 0.0
        %1303 = vmatpush1.msra.mxu0 0.0
        %1304 = vmatprep.mubr.f32.mxu0 0.0
        %1305 = vmatmul.mubr.f32.gmra.mrb[0].mxu0 %v995
        %v1306 = vpop.f32.mrb[0].mxu0
        %v1307 = vadd.f32 0.0, %v1306
        %v1308 = vpop.f32.mrb[0].mxu0
        %1309 = vdwg.mxu0
        %v1310 = vsel %vm1067, %v1307, 0.0
        %1311 = vadd.xlane.f32.xlu0 %v1310
        %v1312 = vpop.xlane.xlu0 %1311
        %v1313 = vrot.slane %v1312, 4
        %v1314 = vadd.f32 %v1312, %v1313
        %v1315 = vrot.slane %v1314, 2
        %v1316 = vadd.f32 %v1314, %v1315
        %v1317 = vrot.slane %v1316, 1
        %v1318 = vadd.f32 %v1316, %v1317
        %s1319 = vtos %v1318
        %v1320 = vstv %s1077
        %1321 = vst [vmem:[%s323] sm:$0xff] %v1320
        %v1322 = vstv %s1157
        %1323 = vst [vmem:[%s330] sm:$0xff] %v1322
        %v1324 = vstv %s1239
        %1325 = vst [vmem:[%s337] sm:$0xff] %v1324
        %v1326 = vstv %s1319
        %1327 = vst [vmem:[%s344] sm:$0xff] %v1326
        %s1328 = sand.u32 %s114, 1
        %s1329 = scalar_lea.sflag [#allocation4], %s1328
        %s1330 = sand.u32 %s114, 1
        %s1331 = smul.addr %s1330, 8
        %s1332 = scalar_lea.vmem [#allocation7], %s1331
        %s1333 = sand.u32 %s32, 1
        %s1334 = scalar_lea.sflag [#allocation9], %s1333
        %s1335 = sand.u32 %s142, 1
        %s1336 = smul.addr %s1335, 8
        %s1337 = scalar_lea.vmem [#allocation8], %s1336
        %s1338 = sand.u32 %s32, 1
        %s1339 = scalar_lea.sflag [#allocation9], %s1338
        %s1340 = sand.u32 %s170, 1
        %s1341 = smul.addr %s1340, 8
        %s1342 = scalar_lea.vmem [#allocation10], %s1341
        %s1343 = sand.u32 %s198, 1
        %s1344 = scalar_lea.sflag [#allocation12], %s1343
        %s1345 = sand.u32 %s198, 1
        %s1346 = smul.addr %s1345, 8
        %s1347 = scalar_lea.vmem [#allocation11], %s1346
        // Predicated region
        $region37: #{tpu_custom_call.1} parent=27 // pred_check
          %p1348 = pneg %p124
        $region38: #{tpu_custom_call.1} parent=27 // pred_check_branch
          %1350 = sbr.rel (%p1348) target = $region40
        $region39: #{tpu_custom_call.1} parent=27 // pred_region
          %s1352 = ssub.s32 128, 128
          %1353 = vsyncadd %s1329, %s1352
          %s1354 = smul.addr %s36, 3
          %s1355 = sadd.s32 %s37, %s1354
          %s1356 = smul.addr %s1355, 128
          %s1357 = scalar_lea.hbm %s2, %s1356
          %s1359 = sshll.u32 %s1332, 4
          %s1360 = int_to_ptr.vmem [resolvable:$true] %s1359
          %1362 = dma.vmem_to_hbm [thread:$0]  %s1360, 128, %s1357, %s1329
        $region40: #{tpu_custom_call.1} parent=27 // pred_fallthru
          _
        // Predicated region
        $region41: #{tpu_custom_call.1} parent=27 // pred_check
          %p1363 = pneg %p152
        $region42: #{tpu_custom_call.1} parent=27 // pred_check_branch
          %1365 = sbr.rel (%p1363) target = $region44
        $region43: #{tpu_custom_call.1} parent=27 // pred_region
          %s1367 = ssub.s32 128, 128
          %1368 = vsyncadd %s1334, %s1367
          %s1369 = smul.addr %s36, 3
          %s1370 = sadd.s32 %s37, %s1369
          %s1371 = smul.addr %s1370, 128
          %s1372 = scalar_lea.hbm %s3, %s1371
          %s1374 = sshll.u32 %s1337, 4
          %s1375 = int_to_ptr.vmem [resolvable:$true] %s1374
          %1377 = dma.vmem_to_hbm [thread:$0]  %s1375, 128, %s1372, %s1334
        $region44: #{tpu_custom_call.1} parent=27 // pred_fallthru
          _
        // Predicated region
        $region45: #{tpu_custom_call.1} parent=27 // pred_check
          %p1378 = pneg %p180
        $region46: #{tpu_custom_call.1} parent=27 // pred_check_branch
          %1380 = sbr.rel (%p1378) target = $region48
        $region47: #{tpu_custom_call.1} parent=27 // pred_region
          %s1382 = ssub.s32 128, 128
          %1383 = vsyncadd %s1339, %s1382
          %s1384 = smul.addr %s36, 3
          %s1385 = sadd.s32 %s37, %s1384
          %s1386 = smul.addr %s1385, 128
          %s1387 = scalar_lea.hbm %s4, %s1386
          %s1389 = sshll.u32 %s1342, 4
          %s1390 = int_to_ptr.vmem [resolvable:$true] %s1389
          %1392 = dma.vmem_to_hbm [thread:$0]  %s1390, 128, %s1387, %s1339
        $region48: #{tpu_custom_call.1} parent=27 // pred_fallthru
          _
        // Predicated region
        $region49: #{tpu_custom_call.1} parent=27 // pred_check
          %p1393 = pneg %p208
        $region50: #{tpu_custom_call.1} parent=27 // pred_check_branch
          %1395 = sbr.rel (%p1393) target = $region52
        $region51: #{tpu_custom_call.1} parent=27 // pred_region
          %s1397 = ssub.s32 128, 128
          %1398 = vsyncadd %s1344, %s1397
          %s1399 = smul.addr %s36, 3
          %s1400 = sadd.s32 %s37, %s1399
          %s1401 = smul.addr %s1400, 128
          %s1402 = scalar_lea.hbm %s5, %s1401
          %s1404 = sshll.u32 %s1347, 4
          %s1405 = int_to_ptr.vmem [resolvable:$true] %s1404
          %1407 = dma.vmem_to_hbm [thread:$0]  %s1405, 128, %s1402, %s1344
        $region52: #{tpu_custom_call.1} parent=27 // pred_fallthru
          _
      $region28: #{tpu_custom_call.1} parent=5 // pred_fallthru
        _
      %p1408 = scmp.le.s32.totalorder 2, %s27
      // Predicated region
      $region53: #{tpu_custom_call.1} parent=5 // pred_check
        %p1409 = pneg %p1408
      $region54: #{tpu_custom_call.1} parent=5 // pred_check_branch
        %1411 = sbr.rel (%p1409) target = $region56
      $region55: #{tpu_custom_call.1} parent=5 // pred_region
        %s1412 = ssub.s32 %s27, 2
        // Predicated region
        $region57: #{tpu_custom_call.1} parent=55 // pred_check
          %p1413 = pneg %p130
        $region58: #{tpu_custom_call.1} parent=55 // pred_check_branch
          %1415 = sbr.rel (%p1413) target = $region60
        $region59: #{tpu_custom_call.1} parent=55 // pred_region
          %s1416 = sand.u32 %s115, 1
          %s1417 = scalar_lea.sflag [#allocation4], %s1416
          %s1418 = sand.u32 %s115, 1
          %s1419 = smul.addr %s1418, 8
          %s1420 = scalar_lea.vmem [#allocation7], %s1419
          %1421 = dma.done %s1417, 128
        $region60: #{tpu_custom_call.1} parent=55 // pred_fallthru
          _
        // Predicated region
        $region61: #{tpu_custom_call.1} parent=55 // pred_check
          %p1422 = pneg %p158
        $region62: #{tpu_custom_call.1} parent=55 // pred_check_branch
          %1424 = sbr.rel (%p1422) target = $region64
        $region63: #{tpu_custom_call.1} parent=55 // pred_region
          %s1425 = sand.u32 %s33, 1
          %s1426 = scalar_lea.sflag [#allocation9], %s1425
          %s1427 = sand.u32 %s143, 1
          %s1428 = smul.addr %s1427, 8
          %s1429 = scalar_lea.vmem [#allocation8], %s1428
          %1430 = dma.done %s1426, 128
        $region64: #{tpu_custom_call.1} parent=55 // pred_fallthru
          _
        // Predicated region
        $region65: #{tpu_custom_call.1} parent=55 // pred_check
          %p1431 = pneg %p186
        $region66: #{tpu_custom_call.1} parent=55 // pred_check_branch
          %1433 = sbr.rel (%p1431) target = $region68
        $region67: #{tpu_custom_call.1} parent=55 // pred_region
          %s1434 = sand.u32 %s33, 1
          %s1435 = scalar_lea.sflag [#allocation9], %s1434
          %s1436 = sand.u32 %s171, 1
          %s1437 = smul.addr %s1436, 8
          %s1438 = scalar_lea.vmem [#allocation10], %s1437
          %1439 = dma.done %s1435, 128
        $region68: #{tpu_custom_call.1} parent=55 // pred_fallthru
          _
        // Predicated region
        $region69: #{tpu_custom_call.1} parent=55 // pred_check
          %p1440 = pneg %p214
        $region70: #{tpu_custom_call.1} parent=55 // pred_check_branch
          %1442 = sbr.rel (%p1440) target = $region72
        $region71: #{tpu_custom_call.1} parent=55 // pred_region
          %s1443 = sand.u32 %s199, 1
          %s1444 = scalar_lea.sflag [#allocation12], %s1443
          %s1445 = sand.u32 %s199, 1
          %s1446 = smul.addr %s1445, 8
          %s1447 = scalar_lea.vmem [#allocation11], %s1446
          %1448 = dma.done %s1444, 128
        $region72: #{tpu_custom_call.1} parent=55 // pred_fallthru
          _
      $region56: #{tpu_custom_call.1} parent=5 // pred_fallthru
        _
    $region6: #{tpu_custom_call.1} parent=1 // loop_footer
      %s31 = sadd.s32 1, %s27
    $region7: #{tpu_custom_call.1} parent=1 // loop_footer_branch
      %26 = sbr.rel target = $region3
    $region8: #{tpu_custom_call.1} parent=1 // loop_exit
      _
    %1449 = vsyncpa [#allocation3], 1
    %s1450 = scalar_lea.sflag [#allocation3], 1
    %1451 = vsyncpa %s1450, 1
    %1452 = vsyncpa [#allocation6], 1
    %s1453 = scalar_lea.sflag [#allocation6], 1
    %1454 = vsyncpa %s1453, 1
    %1455 = vsyncpa [#allocation4], 1
    %s1456 = scalar_lea.sflag [#allocation4], 1
    %1457 = vsyncpa %s1456, 1
    %1458 = vsyncpa [#allocation9], 1
    %s1459 = scalar_lea.sflag [#allocation9], 1
    %1460 = vsyncpa %s1459, 1
    %1461 = vsyncpa [#allocation12], 1
    %s1462 = scalar_lea.sflag [#allocation12], 1
    %1463 = vsyncpa %s1462, 1

</llo_original>
